<compile_context>
chip_gen: v7x
topology: tpu7x:2x2x1
jax: 0.10.0
libtpu: 0.0.40
codegen_flags: <defaults>
</compile_context>

<pallas_src>
import jax
import jax.numpy as jnp
from jax.experimental import pallas as pl
from jax.experimental.pallas import tpu as pltpu

CS = (128, 128, 192)
KS = (9, 5, 3)
CIN0 = 64
BN_EPS = 1e-5
HALO = sum(k // 2 for k in KS)            # 4 + 2 + 1 = 7 context rows actually needed
HALO_PAD = 8                              # rows provisioned per side (8-sublane aligned)
COUT = CS[-1]
C_OUT_TOTAL = CIN0 + COUT                 # 256 output channels = two full vregs wide


def _round_up(x, m):
    return (x + m - 1) // m * m


def _make_kernel(l_true, lt):
    k1, k2, k3 = KS
    n1 = lt + 2 * (k2 // 2 + k3 // 2)     # layer-1 rows needed downstream = lt + 6
    n2 = lt + 2 * (k3 // 2)               # layer-2 rows needed downstream = lt + 2
    n3 = lt
    start1 = HALO_PAD - HALO              # = 1: first xin row read by layer 1
    off1 = -(k2 // 2 + k3 // 2)           # h1[j] <-> global t0 + j + off1
    off2 = -(k3 // 2)                     # h2[j] <-> global t0 + j + off2

    def _layer(h, w, b, n_out, k, start):
        # im2col slab -> ONE wide-contraction MXU matmul; tap partial sums accumulate
        # inside the MXU (MRF/MRB), never through a VMEM f32 accumulator.
        cols = [h[start + t: start + t + n_out, :] for t in range(k)]
        slab = jnp.concatenate(cols, axis=1) if k > 1 else cols[0]
        y = jnp.dot(slab, w, preferred_element_type=jnp.float32)
        # BN scale is pre-folded into w; only bias + ReLU remain.
        return jnp.maximum(y + b, 0.0)

    def kernel(x_ref, halo_ref,
               w1_ref, b1_ref, w2_ref, b2_ref, w3_ref, b3_ref, o_ref):
        t0 = pl.program_id(1) * lt
        x = x_ref[0]                                  # (lt, 64) f32 pass-through (exact)
        halo = halo_ref[0, 0]                         # (16, 64) f32 boundary rows

        # 8-row halos keep x 8-sublane aligned inside xin; one f32 concat, one cast.
        xin = jnp.concatenate([halo[:HALO_PAD], x, halo[HALO_PAD:]], axis=0)
        xin = xin.astype(jnp.bfloat16)                # (lt + 16, 64)

        def _mask(y, off):
            # Rows whose *global* position is outside [0, L) must be zero before the
            # next layer: its 'same' padding sees zeros, not ReLU(BN(conv(0))).
            r = jax.lax.broadcasted_iota(jnp.int32, (y.shape[0], 1), 0)
            g = t0 + r + off
            return jnp.where((g >= 0) & (g < l_true), y, 0.0)

        # layer 1: h1[j] <-> global t0 - 3 + j, taps read xin[j+1 .. j+9]
        h1 = _mask(_layer(xin, w1_ref[...], b1_ref[...], n1, k1, start1), off1)
        h1 = h1.astype(jnp.bfloat16)                  # (lt+6, 128)
        # layer 2: h2[j] <-> global t0 - 1 + j, taps read h1[j .. j+4]
        h2 = _mask(_layer(h1, w2_ref[...], b2_ref[...], n2, k2, 0), off2)
        h2 = h2.astype(jnp.bfloat16)                  # (lt+2, 128)
        # layer 3: h3[j] <-> global t0 + j, taps read h2[j .. j+2]
        h3 = _layer(h2, w3_ref[...], b3_ref[...], n3, k3, 0)   # (lt, 192) f32

        # Fused concat: single lane-dense 256-wide store (pass-through stays exact).
        o_ref[0] = jnp.concatenate([x, h3], axis=1).astype(o_ref.dtype)

    return kernel


def conv_embed_end_nlc(x_blc, kernel_params, *, l_tile=1024):
    """Channels-last entry: x_blc (B, L, 64) -> (B, L, 256) = concat([x, convs(x)], -1)."""
    B, L, cin = x_blc.shape
    assert cin == CIN0
    (w1, b1), (w2, b2), (w3, b3) = kernel_params

    lt = min(_round_up(L, 8), _round_up(max(l_tile, 8), 8))
    if B * (-(-L // lt)) < 2:
        # give the second TensorCore (v7x) work when there would be only one tile
        lt_half = _round_up(-(-L // 2), 8)
        if lt_half >= 8:
            lt = min(lt, lt_half)
    n_l = -(-L // lt)
    l_fit = n_l * lt
    x_fit = x_blc if l_fit == L else jnp.pad(x_blc, ((0, 0), (0, l_fit - L), (0, 0)))

    # Tiny per-tile halo gather (16 rows/tile) straight from x with clipped indices +
    # mask -- no full padded HBM copy of x.
    starts = jnp.arange(n_l) * lt
    idx = jnp.concatenate(
        [starts[:, None] - HALO_PAD + jnp.arange(HALO_PAD)[None, :],   # left-halo rows
         starts[:, None] + lt + jnp.arange(HALO_PAD)[None, :]],        # right-halo rows
        axis=1)                                                        # (n_l, 16)
    valid = (idx >= 0) & (idx < L)
    halos = jnp.where(valid[None, :, :, None],
                      jnp.take(x_fit, jnp.clip(idx, 0, l_fit - 1), axis=1),
                      0.0)                                             # (B, n_l, 16, 64)

    weights = (w1, b1, w2, b2, w3, b3)

    def const_spec(a):
        # Constant-index blocks: Pallas only re-issues the DMA when the block index
        # changes, so the weights stay resident across the whole grid.
        return pl.BlockSpec(a.shape, lambda b, j, _nd=a.ndim: (0,) * _nd)

    # VMEM budget from the chosen tile (double-buffered I/O + resident weights +
    # in-kernel temporaries), clamped below v7x's 64 MiB physical VMEM.
    w_bytes = sum(int(a.size) * a.dtype.itemsize for a in weights)
    rows = lt + 2 * HALO_PAD
    slab_bytes = 2 * rows * (KS[0] * CIN0 + KS[1] * CS[0] + KS[2] * CS[1])   # bf16 im2col
    act_bytes = rows * (6 * CIN0 + 6 * (CS[0] + CS[1]) + 4 * CS[2] + 4 * C_OUT_TOTAL)
    io_bytes = 2 * 4 * lt * (CIN0 + C_OUT_TOTAL) + 4 * 4 * 2 * HALO_PAD * CIN0
    vmem_limit = int(min(48 << 20, max(32 << 20,
                                       2 * w_bytes + io_bytes + slab_bytes + act_bytes)))

    out = pl.pallas_call(
        _make_kernel(L, lt),
        out_shape=jax.ShapeDtypeStruct((B, l_fit, C_OUT_TOTAL), x_blc.dtype),
        grid=(B, n_l),
        in_specs=[pl.BlockSpec((1, lt, CIN0), lambda b, j: (b, j, 0)),
                  pl.BlockSpec((1, 1, 2 * HALO_PAD, CIN0), lambda b, j: (b, j, 0, 0)),
                  *[const_spec(a) for a in weights]],
        out_specs=pl.BlockSpec((1, lt, C_OUT_TOTAL), lambda b, j: (b, j, 0)),
        compiler_params=pltpu.CompilerParams(
            dimension_semantics=("parallel", "parallel"),
            vmem_limit_bytes=vmem_limit),
    )(x_fit, halos, *weights)

    return out[:, :L, :] if l_fit != L else out


def conv_embed_end(x_ncl, kernel_params, *, l_tile=1024):
    """PyTorch-layout entry point: x_ncl (B, 64, L) -> (B, 256, L)."""
    x_blc = jnp.transpose(x_ncl, (0, 2, 1))
    out = conv_embed_end_nlc(x_blc, kernel_params, l_tile=l_tile)
    return jnp.transpose(out, (0, 2, 1))


def init_params(key):
    """Deterministic synthetic parameters. Returns (kernel_params, torch_layout_params)."""
    kernel_params, torch_params = [], []
    cin = CIN0
    for i, (k, cout) in enumerate(zip(KS, CS)):
        kw, kb, kg, kbt = jax.random.split(jax.random.fold_in(key, i), 4)
        w_t = jax.random.normal(kw, (cout, cin, k), jnp.float32) * 0.05   # torch (Cout,Cin,K)
        cbias = jax.random.normal(kb, (cout,), jnp.float32) * 0.1
        gamma = 1.0 + 0.1 * jax.random.normal(kg, (cout,), jnp.float32)
        beta = 0.1 * jax.random.normal(kbt, (cout,), jnp.float32)
        rmean = jnp.zeros((cout,), jnp.float32)      # inference running stats (synthetic)
        rvar = jnp.ones((cout,), jnp.float32)
        # General inference-mode fold: scale into the weights, conv-bias+BN into one bias.
        scale = gamma / jnp.sqrt(rvar + BN_EPS)
        bias = beta + scale * (cbias - rmean)
        w_k = jnp.transpose(w_t, (2, 1, 0))                               # (K, Cin, Cout)
        w_fold = (w_k * scale[None, None, :]).reshape(k * cin, cout).astype(jnp.bfloat16)
        kernel_params.append((w_fold, bias.reshape(1, cout).astype(jnp.float32)))
        torch_params.append((w_t, cbias, gamma, beta, rmean, rvar, k))
        cin = cout
    return kernel_params, torch_params


def reference_ncl(x_ncl, torch_params):
    """Plain-JAX f32 reference mimicking the PyTorch forward (NCL, lax.conv)."""
    h = x_ncl
    for (w, cbias, gamma, beta, rmean, rvar, k) in torch_params:
        pad = k // 2
        h = jax.lax.conv_general_dilated(
            h, w, window_strides=(1,), padding=[(pad, pad)],
            dimension_numbers=("NCH", "OIH", "NCH"))
        h = h + cbias[None, :, None]
        h = (gamma[None, :, None] * (h - rmean[None, :, None])
             / jnp.sqrt(rvar[None, :, None] + BN_EPS) + beta[None, :, None])
        h = jnp.maximum(h, 0.0)
    return jnp.concatenate([x_ncl, h], axis=1)


if __name__ == "__main__":
    key = jax.random.PRNGKey(0)
    kx1, kx2, kp = jax.random.split(key, 3)
    kernel_params, torch_params = init_params(kp)

    # Case 1: small, single tile, l_fit == L (no pad, no trailing slice).
    B1, L1 = 2, 48
    x1 = jax.random.normal(kx1, (B1, CIN0, L1), jnp.float32)     # PyTorch NCL input
    out1 = jax.block_until_ready(conv_embed_end(x1, kernel_params))
    ref1 = reference_ncl(x1, torch_params)
    assert out1.shape == (B1, C_OUT_TOTAL, L1), out1.shape
    assert jnp.allclose(out1[:, :CIN0, :], x1, rtol=0.0, atol=1e-6)
    assert jnp.allclose(out1, ref1, rtol=5e-2, atol=5e-2), \
        float(jnp.max(jnp.abs(out1 - ref1)))

    # Case 2: multi-tile with a remainder (L % lt != 0): exercises halo stitching,
    # per-tile boundary masking with tile offsets, and the pad + trailing-slice path.
    B2, L2 = 1, 100
    x2 = jax.random.normal(kx2, (B2, CIN0, L2), jnp.float32)
    out2 = jax.block_until_ready(conv_embed_end(x2, kernel_params, l_tile=40))
    ref2 = reference_ncl(x2, torch_params)
    assert out2.shape == (B2, C_OUT_TOTAL, L2), out2.shape
    assert jnp.allclose(out2[:, :CIN0, :], x2, rtol=0.0, atol=1e-6)
    assert jnp.allclose(out2, ref2, rtol=5e-2, atol=5e-2), \
        float(jnp.max(jnp.abs(out2 - ref2)))

    print("KERNEL_OK")
</pallas_src>

<mosaic_0001>
module attributes {stable_mosaic.version = 11 : i64} {
  func.func @kernel(%arg0: i32, %arg1: i32, %arg2: memref<1x48x64xf32, #tpu.memory_space<vmem>>, %arg3: memref<1x1x16x64xf32, #tpu.memory_space<vmem>>, %arg4: memref<576x128xbf16, #tpu.memory_space<vmem>>, %arg5: memref<1x128xf32, #tpu.memory_space<vmem>>, %arg6: memref<640x128xbf16, #tpu.memory_space<vmem>>, %arg7: memref<1x128xf32, #tpu.memory_space<vmem>>, %arg8: memref<384x192xbf16, #tpu.memory_space<vmem>>, %arg9: memref<1x192xf32, #tpu.memory_space<vmem>>, %arg10: memref<1x48x256xf32, #tpu.memory_space<vmem>>) attributes {dimension_semantics = [#tpu.dimension_semantics<parallel>, #tpu.dimension_semantics<parallel>], iteration_bounds = array<i64: 2, 1>, scalar_prefetch = 0 : i64, scratch_operands = 0 : i64, tpu.core_type = #tpu.core_type<tc>, window_params = [{transform_indices = @transform_0, window_bounds = array<i64: 1, 48, 64>}, {transform_indices = @transform_1, window_bounds = array<i64: 1, 1, 16, 64>}, {pipeline_mode = #tpu.pipeline_mode<synchronous>, transform_indices = @transform_2, window_bounds = array<i64: 576, 128>}, {pipeline_mode = #tpu.pipeline_mode<synchronous>, transform_indices = @transform_3, window_bounds = array<i64: 1, 128>}, {pipeline_mode = #tpu.pipeline_mode<synchronous>, transform_indices = @transform_4, window_bounds = array<i64: 640, 128>}, {pipeline_mode = #tpu.pipeline_mode<synchronous>, transform_indices = @transform_5, window_bounds = array<i64: 1, 128>}, {pipeline_mode = #tpu.pipeline_mode<synchronous>, transform_indices = @transform_6, window_bounds = array<i64: 384, 192>}, {pipeline_mode = #tpu.pipeline_mode<synchronous>, transform_indices = @transform_7, window_bounds = array<i64: 1, 192>}, {transform_indices = @transform_8, window_bounds = array<i64: 1, 48, 256>}]} {
    %c48_i32 = arith.constant 48 : i32
    %0 = arith.muli %arg1, %c48_i32 : i32
    %c0 = arith.constant 0 : index
    %c0_0 = arith.constant 0 : index
    %c0_1 = arith.constant 0 : index
    %1 = vector.load %arg2[%c0, %c0_0, %c0_1] : memref<1x48x64xf32, #tpu.memory_space<vmem>>, vector<1x48x64xf32>
    %2 = vector.shape_cast %1 : vector<1x48x64xf32> to vector<48x64xf32>
    %c0_2 = arith.constant 0 : index
    %c0_3 = arith.constant 0 : index
    %c0_4 = arith.constant 0 : index
    %c0_5 = arith.constant 0 : index
    %3 = vector.load %arg3[%c0_2, %c0_3, %c0_4, %c0_5] : memref<1x1x16x64xf32, #tpu.memory_space<vmem>>, vector<1x1x16x64xf32>
    %4 = vector.shape_cast %3 : vector<1x1x16x64xf32> to vector<16x64xf32>
    %5 = vector.extract_strided_slice %4 {offsets = [0, 0], sizes = [8, 64], strides = [1, 1]} : vector<16x64xf32> to vector<8x64xf32>
    %6 = vector.extract_strided_slice %4 {offsets = [8, 0], sizes = [8, 64], strides = [1, 1]} : vector<16x64xf32> to vector<8x64xf32>
    %7 = tpu.concatenate %5, %2, %6 in 0 : vector<8x64xf32>, vector<48x64xf32>, vector<8x64xf32> -> vector<64x64xf32>
    %8 = arith.truncf %7 : vector<64x64xf32> to vector<64x64xbf16>
    %c0_6 = arith.constant 0 : index
    %c0_7 = arith.constant 0 : index
    %9 = vector.load %arg4[%c0_6, %c0_7] : memref<576x128xbf16, #tpu.memory_space<vmem>>, vector<576x128xbf16>
    %c0_8 = arith.constant 0 : index
    %c0_9 = arith.constant 0 : index
    %10 = vector.load %arg5[%c0_8, %c0_9] : memref<1x128xf32, #tpu.memory_space<vmem>>, vector<1x128xf32>
    %11 = vector.extract_strided_slice %8 {offsets = [1, 0], sizes = [54, 64], strides = [1, 1]} : vector<64x64xbf16> to vector<54x64xbf16>
    %12 = vector.extract_strided_slice %8 {offsets = [2, 0], sizes = [54, 64], strides = [1, 1]} : vector<64x64xbf16> to vector<54x64xbf16>
    %13 = vector.extract_strided_slice %8 {offsets = [3, 0], sizes = [54, 64], strides = [1, 1]} : vector<64x64xbf16> to vector<54x64xbf16>
    %14 = vector.extract_strided_slice %8 {offsets = [4, 0], sizes = [54, 64], strides = [1, 1]} : vector<64x64xbf16> to vector<54x64xbf16>
    %15 = vector.extract_strided_slice %8 {offsets = [5, 0], sizes = [54, 64], strides = [1, 1]} : vector<64x64xbf16> to vector<54x64xbf16>
    %16 = vector.extract_strided_slice %8 {offsets = [6, 0], sizes = [54, 64], strides = [1, 1]} : vector<64x64xbf16> to vector<54x64xbf16>
    %17 = vector.extract_strided_slice %8 {offsets = [7, 0], sizes = [54, 64], strides = [1, 1]} : vector<64x64xbf16> to vector<54x64xbf16>
    %18 = vector.extract_strided_slice %8 {offsets = [8, 0], sizes = [54, 64], strides = [1, 1]} : vector<64x64xbf16> to vector<54x64xbf16>
    %19 = vector.extract_strided_slice %8 {offsets = [9, 0], sizes = [54, 64], strides = [1, 1]} : vector<64x64xbf16> to vector<54x64xbf16>
    %20 = tpu.concatenate %11, %12, %13, %14, %15, %16, %17, %18, %19 in 1 : vector<54x64xbf16>, vector<54x64xbf16>, vector<54x64xbf16>, vector<54x64xbf16>, vector<54x64xbf16>, vector<54x64xbf16>, vector<54x64xbf16>, vector<54x64xbf16>, vector<54x64xbf16> -> vector<54x576xbf16>
    %cst = arith.constant dense<0.000000e+00> : vector<54x128xf32>
    %21 = tpu.matmul %20, %9, %cst {dimension_numbers = #tpu.dot_dimension_numbers<[1], [0], [0], [1], [0, 0, 1, 1], [], []>} : vector<54x576xbf16>, vector<576x128xbf16>, vector<54x128xf32> -> vector<54x128xf32>
    %22 = vector.broadcast %10 : vector<1x128xf32> to vector<54x128xf32>
    %23 = arith.addf %21, %22 : vector<54x128xf32>
    %cst_10 = arith.constant 0.000000e+00 : f32
    %24 = vector.broadcast %cst_10 : f32 to vector<54x128xf32>
    %25 = arith.maximumf %23, %24 : vector<54x128xf32>
    %26 = tpu.iota {dimensions = array<i32: 0>} : vector<54x1xi32>
    %27 = vector.broadcast %0 : i32 to vector<54x1xi32>
    %28 = arith.addi %27, %26 : vector<54x1xi32>
    %c-3_i32 = arith.constant -3 : i32
    %29 = vector.broadcast %c-3_i32 : i32 to vector<54x1xi32>
    %30 = arith.addi %28, %29 : vector<54x1xi32>
    %c0_i32 = arith.constant 0 : i32
    %31 = vector.broadcast %c0_i32 : i32 to vector<54x1xi32>
    %32 = arith.cmpi sge, %30, %31 : vector<54x1xi32>
    %c48_i32_11 = arith.constant 48 : i32
    %33 = vector.broadcast %c48_i32_11 : i32 to vector<54x1xi32>
    %34 = arith.cmpi slt, %30, %33 : vector<54x1xi32>
    %35 = arith.andi %32, %34 : vector<54x1xi1>
    %cst_12 = arith.constant 0.000000e+00 : f32
    %36 = vector.shape_cast %35 : vector<54x1xi1> to vector<54x1xi1>
    %37 = vector.broadcast %36 : vector<54x1xi1> to vector<54x128xi1>
    %38 = vector.broadcast %cst_12 : f32 to vector<54x128xf32>
    %39 = arith.select %37, %25, %38 : vector<54x128xi1>, vector<54x128xf32>
    %40 = arith.truncf %39 : vector<54x128xf32> to vector<54x128xbf16>
    %c0_13 = arith.constant 0 : index
    %c0_14 = arith.constant 0 : index
    %41 = vector.load %arg6[%c0_13, %c0_14] : memref<640x128xbf16, #tpu.memory_space<vmem>>, vector<640x128xbf16>
    %c0_15 = arith.constant 0 : index
    %c0_16 = arith.constant 0 : index
    %42 = vector.load %arg7[%c0_15, %c0_16] : memref<1x128xf32, #tpu.memory_space<vmem>>, vector<1x128xf32>
    %43 = vector.extract_strided_slice %40 {offsets = [0, 0], sizes = [50, 128], strides = [1, 1]} : vector<54x128xbf16> to vector<50x128xbf16>
    %44 = vector.extract_strided_slice %40 {offsets = [1, 0], sizes = [50, 128], strides = [1, 1]} : vector<54x128xbf16> to vector<50x128xbf16>
    %45 = vector.extract_strided_slice %40 {offsets = [2, 0], sizes = [50, 128], strides = [1, 1]} : vector<54x128xbf16> to vector<50x128xbf16>
    %46 = vector.extract_strided_slice %40 {offsets = [3, 0], sizes = [50, 128], strides = [1, 1]} : vector<54x128xbf16> to vector<50x128xbf16>
    %47 = vector.extract_strided_slice %40 {offsets = [4, 0], sizes = [50, 128], strides = [1, 1]} : vector<54x128xbf16> to vector<50x128xbf16>
    %48 = tpu.concatenate %43, %44, %45, %46, %47 in 1 : vector<50x128xbf16>, vector<50x128xbf16>, vector<50x128xbf16>, vector<50x128xbf16>, vector<50x128xbf16> -> vector<50x640xbf16>
    %cst_17 = arith.constant dense<0.000000e+00> : vector<50x128xf32>
    %49 = tpu.matmul %48, %41, %cst_17 {dimension_numbers = #tpu.dot_dimension_numbers<[1], [0], [0], [1], [0, 0, 1, 1], [], []>} : vector<50x640xbf16>, vector<640x128xbf16>, vector<50x128xf32> -> vector<50x128xf32>
    %50 = vector.broadcast %42 : vector<1x128xf32> to vector<50x128xf32>
    %51 = arith.addf %49, %50 : vector<50x128xf32>
    %cst_18 = arith.constant 0.000000e+00 : f32
    %52 = vector.broadcast %cst_18 : f32 to vector<50x128xf32>
    %53 = arith.maximumf %51, %52 : vector<50x128xf32>
    %54 = tpu.iota {dimensions = array<i32: 0>} : vector<50x1xi32>
    %55 = vector.broadcast %0 : i32 to vector<50x1xi32>
    %56 = arith.addi %55, %54 : vector<50x1xi32>
    %c-1_i32 = arith.constant -1 : i32
    %57 = vector.broadcast %c-1_i32 : i32 to vector<50x1xi32>
    %58 = arith.addi %56, %57 : vector<50x1xi32>
    %c0_i32_19 = arith.constant 0 : i32
    %59 = vector.broadcast %c0_i32_19 : i32 to vector<50x1xi32>
    %60 = arith.cmpi sge, %58, %59 : vector<50x1xi32>
    %c48_i32_20 = arith.constant 48 : i32
    %61 = vector.broadcast %c48_i32_20 : i32 to vector<50x1xi32>
    %62 = arith.cmpi slt, %58, %61 : vector<50x1xi32>
    %63 = arith.andi %60, %62 : vector<50x1xi1>
    %cst_21 = arith.constant 0.000000e+00 : f32
    %64 = vector.shape_cast %63 : vector<50x1xi1> to vector<50x1xi1>
    %65 = vector.broadcast %64 : vector<50x1xi1> to vector<50x128xi1>
    %66 = vector.broadcast %cst_21 : f32 to vector<50x128xf32>
    %67 = arith.select %65, %53, %66 : vector<50x128xi1>, vector<50x128xf32>
    %68 = arith.truncf %67 : vector<50x128xf32> to vector<50x128xbf16>
    %c0_22 = arith.constant 0 : index
    %c0_23 = arith.constant 0 : index
    %69 = vector.load %arg8[%c0_22, %c0_23] : memref<384x192xbf16, #tpu.memory_space<vmem>>, vector<384x192xbf16>
    %c0_24 = arith.constant 0 : index
    %c0_25 = arith.constant 0 : index
    %70 = vector.load %arg9[%c0_24, %c0_25] : memref<1x192xf32, #tpu.memory_space<vmem>>, vector<1x192xf32>
    %71 = vector.extract_strided_slice %68 {offsets = [0, 0], sizes = [48, 128], strides = [1, 1]} : vector<50x128xbf16> to vector<48x128xbf16>
    %72 = vector.extract_strided_slice %68 {offsets = [1, 0], sizes = [48, 128], strides = [1, 1]} : vector<50x128xbf16> to vector<48x128xbf16>
    %73 = vector.extract_strided_slice %68 {offsets = [2, 0], sizes = [48, 128], strides = [1, 1]} : vector<50x128xbf16> to vector<48x128xbf16>
    %74 = tpu.concatenate %71, %72, %73 in 1 : vector<48x128xbf16>, vector<48x128xbf16>, vector<48x128xbf16> -> vector<48x384xbf16>
    %cst_26 = arith.constant dense<0.000000e+00> : vector<48x192xf32>
    %75 = tpu.matmul %74, %69, %cst_26 {dimension_numbers = #tpu.dot_dimension_numbers<[1], [0], [0], [1], [0, 0, 1, 1], [], []>} : vector<48x384xbf16>, vector<384x192xbf16>, vector<48x192xf32> -> vector<48x192xf32>
    %76 = vector.broadcast %70 : vector<1x192xf32> to vector<48x192xf32>
    %77 = arith.addf %75, %76 : vector<48x192xf32>
    %cst_27 = arith.constant 0.000000e+00 : f32
    %78 = vector.broadcast %cst_27 : f32 to vector<48x192xf32>
    %79 = arith.maximumf %77, %78 : vector<48x192xf32>
    %80 = tpu.concatenate %2, %79 in 1 : vector<48x64xf32>, vector<48x192xf32> -> vector<48x256xf32>
    %c0_28 = arith.constant 0 : index
    %c0_29 = arith.constant 0 : index
    %c0_30 = arith.constant 0 : index
    %81 = vector.load %arg10[%c0_28, %c0_29, %c0_30] : memref<1x48x256xf32, #tpu.memory_space<vmem>>, vector<1x48x256xf32>
    %82 = vector.shape_cast %81 : vector<1x48x256xf32> to vector<48x256xf32>
    %83 = vector.shape_cast %80 : vector<48x256xf32> to vector<1x48x256xf32>
    tpu.vector_store %arg10[%c0_28, %c0_29, %c0_30], %83 {strides = array<i32>} : memref<1x48x256xf32, #tpu.memory_space<vmem>>, vector<1x48x256xf32>,
    return
  }
  func.func @transform_0(%arg0: i32, %arg1: i32) -> (i32, i32, i32) {
    %c0_i32 = arith.constant 0 : i32
    %c0_i32_0 = arith.constant 0 : i32
    return %arg0, %arg1, %c0_i32 : i32, i32, i32
  }
  func.func @transform_1(%arg0: i32, %arg1: i32) -> (i32, i32, i32, i32) {
    %c0_i32 = arith.constant 0 : i32
    %c0_i32_0 = arith.constant 0 : i32
    %c0_i32_1 = arith.constant 0 : i32
    return %arg0, %arg1, %c0_i32, %c0_i32_0 : i32, i32, i32, i32
  }
  func.func @transform_2(%arg0: i32, %arg1: i32) -> (i32, i32) {
    %c0_i32 = arith.constant 0 : i32
    %c0_i32_0 = arith.constant 0 : i32
    %c0_i32_1 = arith.constant 0 : i32
    return %c0_i32, %c0_i32_0 : i32, i32
  }
  func.func @transform_3(%arg0: i32, %arg1: i32) -> (i32, i32) {
    %c0_i32 = arith.constant 0 : i32
    %c0_i32_0 = arith.constant 0 : i32
    %c0_i32_1 = arith.constant 0 : i32
    return %c0_i32, %c0_i32_0 : i32, i32
  }
  func.func @transform_4(%arg0: i32, %arg1: i32) -> (i32, i32) {
    %c0_i32 = arith.constant 0 : i32
    %c0_i32_0 = arith.constant 0 : i32
    %c0_i32_1 = arith.constant 0 : i32
    return %c0_i32, %c0_i32_0 : i32, i32
  }
  func.func @transform_5(%arg0: i32, %arg1: i32) -> (i32, i32) {
    %c0_i32 = arith.constant 0 : i32
    %c0_i32_0 = arith.constant 0 : i32
    %c0_i32_1 = arith.constant 0 : i32
    return %c0_i32, %c0_i32_0 : i32, i32
  }
  func.func @transform_6(%arg0: i32, %arg1: i32) -> (i32, i32) {
    %c0_i32 = arith.constant 0 : i32
    %c0_i32_0 = arith.constant 0 : i32
    %c0_i32_1 = arith.constant 0 : i32
    return %c0_i32, %c0_i32_0 : i32, i32
  }
  func.func @transform_7(%arg0: i32, %arg1: i32) -> (i32, i32) {
    %c0_i32 = arith.constant 0 : i32
    %c0_i32_0 = arith.constant 0 : i32
    %c0_i32_1 = arith.constant 0 : i32
    return %c0_i32, %c0_i32_0 : i32, i32
  }
  func.func @transform_8(%arg0: i32, %arg1: i32) -> (i32, i32, i32) {
    %c0_i32 = arith.constant 0 : i32
    %c0_i32_0 = arith.constant 0 : i32
    return %arg0, %arg1, %c0_i32 : i32, i32, i32
  }
}

</mosaic_0001>

<llo_original>
// kernel: tpu_custom_call.1
$region0: #{tpu_custom_call.1}
  #allocation0 [shape = 'u32[]', space=smem, size = 0x4, offset = 0x4, fixed_abs, tag = 'smem constant byte address 0x4 - core index']
  #allocation1 [shape = 'u32[144,128]{1,0:T(1,128)}', space=vmem, size = 0x12000, scoped, tag = 'internal scratch']
  %s0 = inlined_call_operand.hbm [shape: f32[2,48,64], index: 0, kind: input, shape index: {}]
  %s1 = inlined_call_operand.vmem [shape: f32[2,1,16,64], index: 1, kind: input, shape index: {}]
  %s2 = inlined_call_operand.vmem [shape: bf16[576,128], index: 2, kind: input, shape index: {}]
  %s3 = inlined_call_operand.vmem [shape: f32[1,128], index: 3, kind: input, shape index: {}]
  %s4 = inlined_call_operand.vmem [shape: bf16[640,128], index: 4, kind: input, shape index: {}]
  %s5 = inlined_call_operand.vmem [shape: f32[1,128], index: 5, kind: input, shape index: {}]
  %s6 = inlined_call_operand.vmem [shape: bf16[384,192], index: 6, kind: input, shape index: {}]
  %s7 = inlined_call_operand.vmem [shape: f32[1,192], index: 7, kind: input, shape index: {}]
  %s8 = inlined_call_operand.hbm [shape: f32[2,48,256], index: 8, kind: output, shape index: {}]
  %s9 = sld [smem:[#allocation0]]
  $region69: #{tpu_custom_call.1} parent=0
    _
  %s11 = ssub.s32 1, %s9
  %s12 = scalar_select 0, %s11, %s9
  $region1: #{tpu_custom_call.1} parent=0
    #allocation2 [shape = 'u8[49152]{0}', space=vmem, size = 0xc000, scoped, tag = 'input window, operand 0']
    #allocation3 [shape = 's32[2]{0}', space=sflag, size = 0x8, scoped, tag = 'scoped memory for tpu_custom_call.1']
    #allocation4 [shape = 's32[2]{0}', space=sflag, size = 0x8, scoped, tag = 'scoped memory for tpu_custom_call.1']
    #allocation5 [shape = 'u8[98304]{0}', space=vmem, size = 0x18000, scoped, tag = 'output window, operand 0']
    %13 = vsyncpa [#allocation3], 0
    %s14 = scalar_lea.sflag [#allocation3], 1
    %15 = vsyncpa %s14, 0
    %16 = vsyncpa [#allocation4], 0
    %s17 = scalar_lea.sflag [#allocation4], 1
    %18 = vsyncpa %s17, 0
    loop: start=0, step=1, limit=4
    $region2: #{tpu_custom_call.1} parent=1 // loop_pre_header
      _
    $region3: #{tpu_custom_call.1} parent=1 // loop_header
      %s20 = sphi 0, %s24
      %p21 = scmp.ge.s32.totalorder %s20, 4
      %s27 = sphi 0, %s39
      %s28 = sphi 0, %s35
      %s29 = sphi 0, %s27
      %s30 = sphi 0, %s28
      %s31 = sphi 0, %s29
      %s32 = sphi 0, %s30
      %s44 = sphi 0, %s46
      %s47 = sphi 0, %s44
      %s48 = sphi 0, %s47
      %s64 = sphi 0, %s48
      %s72 = sphi 0, %s74
      %s75 = sphi 0, %s72
      %s76 = sphi 0, %s75
      %s92 = sphi 0, %s76
      %s96 = sphi 0, %s96
      %s98 = sphi 0, %s96
      %s99 = sphi 0, %s98
      %s113 = sphi 0, %s99
      %s117 = sphi 0, %s117
      %s119 = sphi 0, %s117
      %s120 = sphi 0, %s119
      %s134 = sphi 0, %s120
      %s138 = sphi 0, %s138
      %s140 = sphi 0, %s138
      %s141 = sphi 0, %s140
      %s155 = sphi 0, %s141
      %s159 = sphi 0, %s159
      %s161 = sphi 0, %s159
      %s162 = sphi 0, %s161
      %s176 = sphi 0, %s162
      %s180 = sphi 0, %s180
      %s182 = sphi 0, %s180
      %s183 = sphi 0, %s182
      %s197 = sphi 0, %s183
      %s201 = sphi 0, %s201
      %s203 = sphi 0, %s201
      %s204 = sphi 0, %s203
      %s218 = sphi 0, %s204
      %s226 = sphi 0, %s228
      %s229 = sphi 0, %s226
      %s230 = sphi 0, %s229
      %s246 = sphi 0, %s230
    $region4: #{tpu_custom_call.1} parent=1 // loop_header_branch
      %23 = sbr.rel (%p21) target = $region8
    $region5: #{tpu_custom_call.1} parent=1 // loop_body
      %s25 = ssub.s32 %s20, 1
      %s26 = ssub.s32 %s20, 2
      %s33 = sadd.s32 1, %s28
      %p34 = scmp.ge.s32.totalorder %s33, 1
      %s35 = scalar_select %p34, 0, %s33
      %s36 = sadd.s32 1, %s27
      %s37 = scalar_select %p34, %s36, %s27
      %p38 = scmp.ge.s32.totalorder %s37, 2
      %s39 = scalar_select %p38, 0, %s37
      %s40 = ssub.s32 %s27, %s39
      %s41 = ssub.s32 %s28, %s35
      %s42 = sor.u32 %s40, %s41
      %p43 = scmp.eq.s32.totalorder %s42, 0
      %s45 = sadd.s32 %s44, 1
      %s46 = scalar_select %p43, %s44, %s45
      %p49 = pneg %p43
      %p50 = scmp.eq.s32.totalorder %s20, 1
      %p51 = por %p49, %p50
      %p52 = scmp.ne.s32.totalorder %s44, %s47
      %p53 = scmp.eq.s32.totalorder %s20, 0
      %p54 = por %p52, %p53
      %p55 = scmp.ne.s32.totalorder %s44, %s47
      %p56 = scmp.eq.s32.totalorder %s25, 1
      %p57 = por %p55, %p56
      %p58 = scmp.ne.s32.totalorder %s47, %s48
      %p59 = scmp.eq.s32.totalorder %s25, 0
      %p60 = por %p58, %p59
      %p61 = scmp.ne.s32.totalorder %s47, %s48
      %p62 = scmp.eq.s32.totalorder %s26, 1
      %p63 = por %p61, %p62
      %p65 = scmp.ne.s32.totalorder %s48, %s64
      %p66 = scmp.eq.s32.totalorder %s26, 0
      %p67 = por %p65, %p66
      %s68 = ssub.s32 %s27, %s39
      %s69 = ssub.s32 %s28, %s35
      %s70 = sor.u32 %s68, %s69
      %p71 = scmp.eq.s32.totalorder %s70, 0
      %s73 = sadd.s32 %s72, 1
      %s74 = scalar_select %p71, %s72, %s73
      %p77 = pneg %p71
      %p78 = scmp.eq.s32.totalorder %s20, 1
      %p79 = por %p77, %p78
      %p80 = scmp.ne.s32.totalorder %s72, %s75
      %p81 = scmp.eq.s32.totalorder %s20, 0
      %p82 = por %p80, %p81
      %p83 = scmp.ne.s32.totalorder %s72, %s75
      %p84 = scmp.eq.s32.totalorder %s25, 1
      %p85 = por %p83, %p84
      %p86 = scmp.ne.s32.totalorder %s75, %s76
      %p87 = scmp.eq.s32.totalorder %s25, 0
      %p88 = por %p86, %p87
      %p89 = scmp.ne.s32.totalorder %s75, %s76
      %p90 = scmp.eq.s32.totalorder %s26, 1
      %p91 = por %p89, %p90
      %p93 = scmp.ne.s32.totalorder %s76, %s92
      %p94 = scmp.eq.s32.totalorder %s26, 0
      %p95 = por %p93, %p94
      %s97 = sadd.s32 %s96, 1
      %p100 = scmp.eq.s32.totalorder %s20, 1
      %p101 = scmp.ne.s32.totalorder %s96, %s98
      %p102 = scmp.eq.s32.totalorder %s20, 0
      %p103 = por %p101, %p102
      %p104 = scmp.ne.s32.totalorder %s96, %s98
      %p105 = scmp.eq.s32.totalorder %s25, 1
      %p106 = por %p104, %p105
      %p107 = scmp.ne.s32.totalorder %s98, %s99
      %p108 = scmp.eq.s32.totalorder %s25, 0
      %p109 = por %p107, %p108
      %p110 = scmp.ne.s32.totalorder %s98, %s99
      %p111 = scmp.eq.s32.totalorder %s26, 1
      %p112 = por %p110, %p111
      %p114 = scmp.ne.s32.totalorder %s99, %s113
      %p115 = scmp.eq.s32.totalorder %s26, 0
      %p116 = por %p114, %p115
      %s118 = sadd.s32 %s117, 1
      %p121 = scmp.eq.s32.totalorder %s20, 1
      %p122 = scmp.ne.s32.totalorder %s117, %s119
      %p123 = scmp.eq.s32.totalorder %s20, 0
      %p124 = por %p122, %p123
      %p125 = scmp.ne.s32.totalorder %s117, %s119
      %p126 = scmp.eq.s32.totalorder %s25, 1
      %p127 = por %p125, %p126
      %p128 = scmp.ne.s32.totalorder %s119, %s120
      %p129 = scmp.eq.s32.totalorder %s25, 0
      %p130 = por %p128, %p129
      %p131 = scmp.ne.s32.totalorder %s119, %s120
      %p132 = scmp.eq.s32.totalorder %s26, 1
      %p133 = por %p131, %p132
      %p135 = scmp.ne.s32.totalorder %s120, %s134
      %p136 = scmp.eq.s32.totalorder %s26, 0
      %p137 = por %p135, %p136
      %s139 = sadd.s32 %s138, 1
      %p142 = scmp.eq.s32.totalorder %s20, 1
      %p143 = scmp.ne.s32.totalorder %s138, %s140
      %p144 = scmp.eq.s32.totalorder %s20, 0
      %p145 = por %p143, %p144
      %p146 = scmp.ne.s32.totalorder %s138, %s140
      %p147 = scmp.eq.s32.totalorder %s25, 1
      %p148 = por %p146, %p147
      %p149 = scmp.ne.s32.totalorder %s140, %s141
      %p150 = scmp.eq.s32.totalorder %s25, 0
      %p151 = por %p149, %p150
      %p152 = scmp.ne.s32.totalorder %s140, %s141
      %p153 = scmp.eq.s32.totalorder %s26, 1
      %p154 = por %p152, %p153
      %p156 = scmp.ne.s32.totalorder %s141, %s155
      %p157 = scmp.eq.s32.totalorder %s26, 0
      %p158 = por %p156, %p157
      %s160 = sadd.s32 %s159, 1
      %p163 = scmp.eq.s32.totalorder %s20, 1
      %p164 = scmp.ne.s32.totalorder %s159, %s161
      %p165 = scmp.eq.s32.totalorder %s20, 0
      %p166 = por %p164, %p165
      %p167 = scmp.ne.s32.totalorder %s159, %s161
      %p168 = scmp.eq.s32.totalorder %s25, 1
      %p169 = por %p167, %p168
      %p170 = scmp.ne.s32.totalorder %s161, %s162
      %p171 = scmp.eq.s32.totalorder %s25, 0
      %p172 = por %p170, %p171
      %p173 = scmp.ne.s32.totalorder %s161, %s162
      %p174 = scmp.eq.s32.totalorder %s26, 1
      %p175 = por %p173, %p174
      %p177 = scmp.ne.s32.totalorder %s162, %s176
      %p178 = scmp.eq.s32.totalorder %s26, 0
      %p179 = por %p177, %p178
      %s181 = sadd.s32 %s180, 1
      %p184 = scmp.eq.s32.totalorder %s20, 1
      %p185 = scmp.ne.s32.totalorder %s180, %s182
      %p186 = scmp.eq.s32.totalorder %s20, 0
      %p187 = por %p185, %p186
      %p188 = scmp.ne.s32.totalorder %s180, %s182
      %p189 = scmp.eq.s32.totalorder %s25, 1
      %p190 = por %p188, %p189
      %p191 = scmp.ne.s32.totalorder %s182, %s183
      %p192 = scmp.eq.s32.totalorder %s25, 0
      %p193 = por %p191, %p192
      %p194 = scmp.ne.s32.totalorder %s182, %s183
      %p195 = scmp.eq.s32.totalorder %s26, 1
      %p196 = por %p194, %p195
      %p198 = scmp.ne.s32.totalorder %s183, %s197
      %p199 = scmp.eq.s32.totalorder %s26, 0
      %p200 = por %p198, %p199
      %s202 = sadd.s32 %s201, 1
      %p205 = scmp.eq.s32.totalorder %s20, 1
      %p206 = scmp.ne.s32.totalorder %s201, %s203
      %p207 = scmp.eq.s32.totalorder %s20, 0
      %p208 = por %p206, %p207
      %p209 = scmp.ne.s32.totalorder %s201, %s203
      %p210 = scmp.eq.s32.totalorder %s25, 1
      %p211 = por %p209, %p210
      %p212 = scmp.ne.s32.totalorder %s203, %s204
      %p213 = scmp.eq.s32.totalorder %s25, 0
      %p214 = por %p212, %p213
      %p215 = scmp.ne.s32.totalorder %s203, %s204
      %p216 = scmp.eq.s32.totalorder %s26, 1
      %p217 = por %p215, %p216
      %p219 = scmp.ne.s32.totalorder %s204, %s218
      %p220 = scmp.eq.s32.totalorder %s26, 0
      %p221 = por %p219, %p220
      %s222 = ssub.s32 %s27, %s39
      %s223 = ssub.s32 %s28, %s35
      %s224 = sor.u32 %s222, %s223
      %p225 = scmp.eq.s32.totalorder %s224, 0
      %s227 = sadd.s32 %s226, 1
      %s228 = scalar_select %p225, %s226, %s227
      %p231 = pneg %p225
      %p232 = scmp.eq.s32.totalorder %s20, 1
      %p233 = por %p231, %p232
      %p234 = scmp.ne.s32.totalorder %s226, %s229
      %p235 = scmp.eq.s32.totalorder %s20, 0
      %p236 = por %p234, %p235
      %p237 = scmp.ne.s32.totalorder %s226, %s229
      %p238 = scmp.eq.s32.totalorder %s25, 1
      %p239 = por %p237, %p238
      %p240 = scmp.ne.s32.totalorder %s229, %s230
      %p241 = scmp.eq.s32.totalorder %s25, 0
      %p242 = por %p240, %p241
      %p243 = scmp.ne.s32.totalorder %s229, %s230
      %p244 = scmp.eq.s32.totalorder %s26, 1
      %p245 = por %p243, %p244
      %p247 = scmp.ne.s32.totalorder %s230, %s246
      %p248 = scmp.eq.s32.totalorder %s26, 0
      %p249 = por %p247, %p248
      %p250 = scmp.le.s32.totalorder 1, %s20
      %p251 = scmp.lt.s32.totalorder %s20, 3
      %p252 = pnand %p250, %p251
      %p253 = pneg %p252
      // Predicated region
      $region9: #{tpu_custom_call.1} parent=5 // pred_check
        _
      $region10: #{tpu_custom_call.1} parent=5 // pred_check_branch
        %255 = sbr.rel (%p252) target = $region12
      $region11: #{tpu_custom_call.1} parent=5 // pred_region
        %s256 = ssub.s32 %s20, 1
        // Predicated region
        $region13: #{tpu_custom_call.1} parent=11 // pred_check
          %p257 = pneg %p109
        $region14: #{tpu_custom_call.1} parent=11 // pred_check_branch
          %259 = sbr.rel (%p257) target = $region16
        $region15: #{tpu_custom_call.1} parent=11 // pred_region
          _
        $region16: #{tpu_custom_call.1} parent=11 // pred_fallthru
          _
        // Predicated region
        $region17: #{tpu_custom_call.1} parent=11 // pred_check
          %p260 = pneg %p130
        $region18: #{tpu_custom_call.1} parent=11 // pred_check_branch
          %262 = sbr.rel (%p260) target = $region20
        $region19: #{tpu_custom_call.1} parent=11 // pred_region
          _
        $region20: #{tpu_custom_call.1} parent=11 // pred_fallthru
          _
        // Predicated region
        $region21: #{tpu_custom_call.1} parent=11 // pred_check
          %p263 = pneg %p151
        $region22: #{tpu_custom_call.1} parent=11 // pred_check_branch
          %265 = sbr.rel (%p263) target = $region24
        $region23: #{tpu_custom_call.1} parent=11 // pred_region
          _
        $region24: #{tpu_custom_call.1} parent=11 // pred_fallthru
          _
        // Predicated region
        $region25: #{tpu_custom_call.1} parent=11 // pred_check
          %p266 = pneg %p172
        $region26: #{tpu_custom_call.1} parent=11 // pred_check_branch
          %268 = sbr.rel (%p266) target = $region28
        $region27: #{tpu_custom_call.1} parent=11 // pred_region
          _
        $region28: #{tpu_custom_call.1} parent=11 // pred_fallthru
          _
        // Predicated region
        $region29: #{tpu_custom_call.1} parent=11 // pred_check
          %p269 = pneg %p193
        $region30: #{tpu_custom_call.1} parent=11 // pred_check_branch
          %271 = sbr.rel (%p269) target = $region32
        $region31: #{tpu_custom_call.1} parent=11 // pred_region
          _
        $region32: #{tpu_custom_call.1} parent=11 // pred_fallthru
          _
        // Predicated region
        $region33: #{tpu_custom_call.1} parent=11 // pred_check
          %p272 = pneg %p214
        $region34: #{tpu_custom_call.1} parent=11 // pred_check_branch
          %274 = sbr.rel (%p272) target = $region36
        $region35: #{tpu_custom_call.1} parent=11 // pred_region
          _
        $region36: #{tpu_custom_call.1} parent=11 // pred_fallthru
          _
      $region12: #{tpu_custom_call.1} parent=5 // pred_fallthru
        _
      %p275 = scmp.lt.s32.totalorder %s20, 2
      // Predicated region
      $region37: #{tpu_custom_call.1} parent=5 // pred_check
        %p276 = pneg %p275
      $region38: #{tpu_custom_call.1} parent=5 // pred_check_branch
        %278 = sbr.rel (%p276) target = $region40
      $region39: #{tpu_custom_call.1} parent=5 // pred_region
        // Predicated region
        $region41: #{tpu_custom_call.1} parent=39 // pred_check
          %p279 = pneg %p54
        $region42: #{tpu_custom_call.1} parent=39 // pred_check_branch
          %281 = sbr.rel (%p279) target = $region44
        $region43: #{tpu_custom_call.1} parent=39 // pred_region
          %s282 = sand.u32 %s44, 1
          %s283 = scalar_lea.sflag [#allocation3], %s282
          %s284 = sand.u32 %s44, 1
          %s285 = smul.addr %s284, 48
          %s286 = scalar_lea.vmem [#allocation2], %s285
          %s287 = smul.u32 6, %s28
          %s289 = ssub.s32 768, 768
          %290 = vsyncadd %s283, %s289
          %s291 = smul.addr %s27, 6
          %s292 = sadd.s32 %s287, %s291
          %s293 = smul.addr %s292, 128
          %s294 = scalar_lea.hbm %s0, %s293
          %s295 = sshll.u32 %s286, 4
          %s296 = int_to_ptr.vmem [resolvable:$true] %s295
          %301 = dma.hbm_to_vmem [thread:$0]  %s294, 768, %s296, %s283, 128, 128, 8
        $region44: #{tpu_custom_call.1} parent=39 // pred_fallthru
          _
        // Predicated region
        $region45: #{tpu_custom_call.1} parent=39 // pred_check
          %p302 = pneg %p82
        $region46: #{tpu_custom_call.1} parent=39 // pred_check_branch
          %304 = sbr.rel (%p302) target = $region48
        $region47: #{tpu_custom_call.1} parent=39 // pred_region
          %p305 = scmp.lt.s32.totalorder %s27, 1
          %s306 = scalar_select %p305, %s27, 1
          %p307 = scmp.lt.s32.totalorder %s28, 0
          %s308 = scalar_select %p307, %s28, 0
          %s309 = smul.addr %s308, 2
          %s310 = smul.addr %s306, 2
          %s311 = sadd.s32 %s309, %s310
          %s312 = smul.addr %s311, 8
          %s313 = scalar_lea.vmem %s1, %s312
        $region48: #{tpu_custom_call.1} parent=39 // pred_fallthru
          _
      $region40: #{tpu_custom_call.1} parent=5 // pred_fallthru
        _
      %p314 = scmp.le.s32.totalorder 1, %s20
      %p315 = scmp.lt.s32.totalorder %s20, 3
      %p316 = pnand %p314, %p315
      %p317 = pneg %p316
      // Predicated region
      $region49: #{tpu_custom_call.1} parent=5 // pred_check
        _
      $region50: #{tpu_custom_call.1} parent=5 // pred_check_branch
        %319 = sbr.rel (%p316) target = $region52
      $region51: #{tpu_custom_call.1} parent=5 // pred_region
        %s320 = ssub.s32 %s20, 1
        %s321 = sand.u32 %s47, 1
        %s322 = scalar_lea.sflag [#allocation3], %s321
        %s323 = sand.u32 %s47, 1
        %s324 = smul.addr %s323, 48
        %s325 = scalar_lea.vmem [#allocation2], %s324
        // Predicated region
        $region53: #{tpu_custom_call.1} parent=51 // pred_check
          %p326 = pneg %p60
        $region54: #{tpu_custom_call.1} parent=51 // pred_check_branch
          %328 = sbr.rel (%p326) target = $region56
        $region55: #{tpu_custom_call.1} parent=51 // pred_region
          %329 = dma.done %s322, 768
        $region56: #{tpu_custom_call.1} parent=51 // pred_fallthru
          _
        %s330 = sand.u32 %s47, 1
        %s331 = scalar_lea.sflag [#allocation3], %s330
        %s332 = sand.u32 %s47, 1
        %s333 = smul.addr %s332, 48
        %s334 = scalar_lea.vmem [#allocation2], %s333
        %p335 = pneg %p60
        %p336 = pneg %p57
        %p337 = scmp.lt.s32.totalorder %s29, 1
        %s338 = scalar_select %p337, %s29, 1
        %p339 = scmp.lt.s32.totalorder %s30, 0
        %s340 = scalar_select %p339, %s30, 0
        %s341 = smul.addr %s340, 2
        %s342 = smul.addr %s338, 2
        %s343 = sadd.s32 %s341, %s342
        %s344 = smul.addr %s343, 8
        %s345 = scalar_lea.vmem %s1, %s344
        %p346 = pneg %p88
        %p347 = pneg %p85
        %p348 = pneg %p109
        %p349 = pneg %p106
        %p350 = pneg %p130
        %p351 = pneg %p127
        %p352 = pneg %p151
        %p353 = pneg %p148
        %p354 = pneg %p172
        %p355 = pneg %p169
        %p356 = pneg %p193
        %p357 = pneg %p190
        %p358 = pneg %p214
        %p359 = pneg %p211
        %p360 = pneg %p242
        %p361 = pneg %p239
        %s362 = sand.u32 %s229, 1
        %s363 = scalar_lea.sflag [#allocation4], %s362
        %s364 = sand.u32 %s229, 1
        %s365 = smul.addr %s364, 96
        %s366 = scalar_lea.vmem [#allocation5], %s365
        %s367 = smul.u32 6, %s30
        %p368 = scmp.lt.s32.totalorder %s29, 1
        %s369 = scalar_select %p368, %s29, 1
        %p370 = scmp.lt.s32.totalorder %s30, 0
        %s371 = scalar_select %p370, %s30, 0
        %s372 = smul.addr %s371, 2
        %s373 = smul.addr %s369, 2
        %s374 = sadd.s32 %s372, %s373
        %s375 = smul.addr %s374, 8
        %s376 = scalar_lea.vmem %s1, %s375
        %s377 = smul.u32 6, %s30
        %s379 = smul.u32 %s30, 48
        %v380 = vld [vmem:[%s325] sm:$0xff]
        %v381 = vld [vmem:[%s325 + $0x8] sm:$0xff]
        %v382 = vld [vmem:[%s325 + $0x10] sm:$0xff]
        %v383 = vld [vmem:[%s325 + $0x18] sm:$0xff]
        %v384 = vld [vmem:[%s325 + $0x20] sm:$0xff]
        %v385 = vld [vmem:[%s325 + $0x28] sm:$0xff]
        %v386 = vld [vmem:[%s376] sm:$0xff]
        %v387 = vld [vmem:[%s376 + $0x8] sm:$0xff]
        %v388 = vpack.c.bf16 %v380, %v386
        %v389 = vpack.c.bf16 %v382, %v381
        %v390 = vpack.c.bf16 %v384, %v383
        %v391 = vpack.c.bf16 %v387, %v385
        %v392 = vld [vmem:[%s2] sm:$0xf]
        %v393 = vld [vmem:[%s2 + $0x4] sm:$0xf]
        %v394 = vld [vmem:[%s2 + $0x8] sm:$0xf]
        %v395 = vld [vmem:[%s2 + $0xc] sm:$0xf]
        %v396 = vld [vmem:[%s2 + $0x10] sm:$0xf]
        %v397 = vld [vmem:[%s2 + $0x14] sm:$0xf]
        %v398 = vld [vmem:[%s2 + $0x18] sm:$0xf]
        %v399 = vld [vmem:[%s2 + $0x1c] sm:$0xf]
        %v400 = vld [vmem:[%s2 + $0x20] sm:$0xf]
        %v401 = vld [vmem:[%s2 + $0x24] sm:$0xf]
        %v402 = vld [vmem:[%s2 + $0x28] sm:$0xf]
        %v403 = vld [vmem:[%s2 + $0x2c] sm:$0xf]
        %v404 = vld [vmem:[%s2 + $0x30] sm:$0xf]
        %v405 = vld [vmem:[%s2 + $0x34] sm:$0xf]
        %v406 = vld [vmem:[%s2 + $0x38] sm:$0xf]
        %v407 = vld [vmem:[%s2 + $0x3c] sm:$0xf]
        %v408 = vld [vmem:[%s2 + $0x40] sm:$0xf]
        %v409 = vld [vmem:[%s2 + $0x44] sm:$0xf]
        %v410 = vld [vmem:[%s2 + $0x48] sm:$0xf]
        %v411 = vld [vmem:[%s2 + $0x4c] sm:$0xf]
        %v412 = vld [vmem:[%s2 + $0x50] sm:$0xf]
        %v413 = vld [vmem:[%s2 + $0x54] sm:$0xf]
        %v414 = vld [vmem:[%s2 + $0x58] sm:$0xf]
        %v415 = vld [vmem:[%s2 + $0x5c] sm:$0xf]
        %v416 = vld [vmem:[%s2 + $0x60] sm:$0xf]
        %v417 = vld [vmem:[%s2 + $0x64] sm:$0xf]
        %v418 = vld [vmem:[%s2 + $0x68] sm:$0xf]
        %v419 = vld [vmem:[%s2 + $0x6c] sm:$0xf]
        %v420 = vld [vmem:[%s2 + $0x70] sm:$0xf]
        %v421 = vld [vmem:[%s2 + $0x74] sm:$0xf]
        %v422 = vld [vmem:[%s2 + $0x78] sm:$0xf]
        %v423 = vld [vmem:[%s2 + $0x7c] sm:$0xf]
        %v424 = vld [vmem:[%s2 + $0x80] sm:$0xf]
        %v425 = vld [vmem:[%s2 + $0x84] sm:$0xf]
        %v426 = vld [vmem:[%s2 + $0x88] sm:$0xf]
        %v427 = vld [vmem:[%s2 + $0x8c] sm:$0xf]
        %v428 = vld [vmem:[%s2 + $0x90] sm:$0xf]
        %v429 = vld [vmem:[%s2 + $0x94] sm:$0xf]
        %v430 = vld [vmem:[%s2 + $0x98] sm:$0xf]
        %v431 = vld [vmem:[%s2 + $0x9c] sm:$0xf]
        %v432 = vld [vmem:[%s2 + $0xa0] sm:$0xf]
        %v433 = vld [vmem:[%s2 + $0xa4] sm:$0xf]
        %v434 = vld [vmem:[%s2 + $0xa8] sm:$0xf]
        %v435 = vld [vmem:[%s2 + $0xac] sm:$0xf]
        %v436 = vld [vmem:[%s2 + $0xb0] sm:$0xf]
        %v437 = vld [vmem:[%s2 + $0xb4] sm:$0xf]
        %v438 = vld [vmem:[%s2 + $0xb8] sm:$0xf]
        %v439 = vld [vmem:[%s2 + $0xbc] sm:$0xf]
        %v440 = vld [vmem:[%s2 + $0xc0] sm:$0xf]
        %v441 = vld [vmem:[%s2 + $0xc4] sm:$0xf]
        %v442 = vld [vmem:[%s2 + $0xc8] sm:$0xf]
        %v443 = vld [vmem:[%s2 + $0xcc] sm:$0xf]
        %v444 = vld [vmem:[%s2 + $0xd0] sm:$0xf]
        %v445 = vld [vmem:[%s2 + $0xd4] sm:$0xf]
        %v446 = vld [vmem:[%s2 + $0xd8] sm:$0xf]
        %v447 = vld [vmem:[%s2 + $0xdc] sm:$0xf]
        %v448 = vld [vmem:[%s2 + $0xe0] sm:$0xf]
        %v449 = vld [vmem:[%s2 + $0xe4] sm:$0xf]
        %v450 = vld [vmem:[%s2 + $0xe8] sm:$0xf]
        %v451 = vld [vmem:[%s2 + $0xec] sm:$0xf]
        %v452 = vld [vmem:[%s2 + $0xf0] sm:$0xf]
        %v453 = vld [vmem:[%s2 + $0xf4] sm:$0xf]
        %v454 = vld [vmem:[%s2 + $0xf8] sm:$0xf]
        %v455 = vld [vmem:[%s2 + $0xfc] sm:$0xf]
        %v456 = vld [vmem:[%s2 + $0x100] sm:$0xf]
        %v457 = vld [vmem:[%s2 + $0x104] sm:$0xf]
        %v458 = vld [vmem:[%s2 + $0x108] sm:$0xf]
        %v459 = vld [vmem:[%s2 + $0x10c] sm:$0xf]
        %v460 = vld [vmem:[%s2 + $0x110] sm:$0xf]
        %v461 = vld [vmem:[%s2 + $0x114] sm:$0xf]
        %v462 = vld [vmem:[%s2 + $0x118] sm:$0xf]
        %v463 = vld [vmem:[%s2 + $0x11c] sm:$0xf]
        %v464 = vld [vmem:[%s3] sm:$0x1]
        %vm465 = vsmask.f32 7424
        %v467 = vshrl.u32 %v388, 16
        %v469 = vshll.u32 %v388, 16
        %v471 = vrot.slane %v469, 1
        %v472 = vor.u32 %v467, %v471
        %v474 = vshll.u32 %v389, 16
        %v476 = vrot.slane %v474, 1
        %v477 = vsel %vm465, %v472, %v476
        %v478 = vshrl.u32 %v389, 16
        %v480 = vor.u32 %v478, %v476
        %v482 = vshll.u32 %v390, 16
        %v484 = vrot.slane %v482, 1
        %v485 = vsel %vm465, %v480, %v484
        %v486 = vshrl.u32 %v390, 16
        %v488 = vor.u32 %v486, %v484
        %v490 = vshll.u32 %v391, 16
        %v492 = vrot.slane %v490, 1
        %v493 = vsel %vm465, %v488, %v492
        %v494 = vshrl.u32 %v391, 16
        %v496 = vor.u32 %v494, %v492
        %497 = vrot.lane.b32.xlu0 %v477, 64
        %v498 = vpop.permute.xlu0 %497
        %499 = vrot.lane.b32.xlu0 %v485, 64
        %v500 = vpop.permute.xlu0 %499
        %501 = vrot.lane.b32.xlu0 %v493, 64
        %v502 = vpop.permute.xlu0 %501
        %503 = vrot.lane.b32.xlu0 %v496, 64
        %v504 = vpop.permute.xlu0 %503
        %vm509 = vcmask 1046528
        %v510 = vrot.slane %v388, 1
        %v511 = vrot.slane %v389, 1
        %v512 = vsel %vm509, %v510, %v511
        %v513 = vrot.slane %v390, 1
        %v514 = vsel %vm509, %v511, %v513
        %v515 = vrot.slane %v391, 1
        %v516 = vsel %vm509, %v513, %v515
        %vm517 = vsmask.f32 6400
        %v518 = vrot.slane %v467, 1
        %v519 = vrot.slane %v469, 2
        %v520 = vor.u32 %v518, %v519
        %v521 = vrot.slane %v478, 1
        %v522 = vrot.slane %v474, 2
        %v523 = vor.u32 %v521, %v522
        %v524 = vsel %vm517, %v520, %v523
        %v525 = vrot.slane %v486, 1
        %v526 = vrot.slane %v482, 2
        %v527 = vor.u32 %v525, %v526
        %v528 = vsel %vm517, %v523, %v527
        %v529 = vrot.slane %v494, 1
        %v530 = vrot.slane %v490, 2
        %v531 = vor.u32 %v529, %v530
        %v532 = vsel %vm517, %v527, %v531
        %533 = vrot.lane.b32.xlu0 %v524, 64
        %v534 = vpop.permute.xlu0 %533
        %535 = vrot.lane.b32.xlu0 %v528, 64
        %v536 = vpop.permute.xlu0 %535
        %537 = vrot.lane.b32.xlu0 %v532, 64
        %v538 = vpop.permute.xlu0 %537
        %539 = vrot.lane.b32.xlu0 %v531, 64
        %v540 = vpop.permute.xlu0 %539
        %vm541 = vcmask 1045504
        %v542 = vrot.slane %v388, 2
        %v543 = vrot.slane %v389, 2
        %v544 = vsel %vm541, %v542, %v543
        %v545 = vrot.slane %v390, 2
        %v546 = vsel %vm541, %v543, %v545
        %v547 = vrot.slane %v391, 2
        %v548 = vsel %vm541, %v545, %v547
        %vm549 = vsmask.f32 5376
        %v550 = vrot.slane %v467, 2
        %v551 = vrot.slane %v469, 3
        %v552 = vor.u32 %v550, %v551
        %v553 = vrot.slane %v478, 2
        %v554 = vrot.slane %v474, 3
        %v555 = vor.u32 %v553, %v554
        %v556 = vsel %vm549, %v552, %v555
        %v557 = vrot.slane %v486, 2
        %v558 = vrot.slane %v482, 3
        %v559 = vor.u32 %v557, %v558
        %v560 = vsel %vm549, %v555, %v559
        %v561 = vrot.slane %v494, 2
        %v562 = vrot.slane %v490, 3
        %v563 = vor.u32 %v561, %v562
        %v564 = vsel %vm549, %v559, %v563
        %565 = vrot.lane.b32.xlu0 %v556, 64
        %v566 = vpop.permute.xlu0 %565
        %567 = vrot.lane.b32.xlu0 %v560, 64
        %v568 = vpop.permute.xlu0 %567
        %569 = vrot.lane.b32.xlu0 %v564, 64
        %v570 = vpop.permute.xlu0 %569
        %571 = vrot.lane.b32.xlu0 %v563, 64
        %v572 = vpop.permute.xlu0 %571
        %vm573 = vcmask 1044480
        %v574 = vrot.slane %v388, 3
        %v575 = vrot.slane %v389, 3
        %v576 = vsel %vm573, %v574, %v575
        %v577 = vrot.slane %v390, 3
        %v578 = vsel %vm573, %v575, %v577
        %v579 = vrot.slane %v391, 3
        %v580 = vsel %vm573, %v577, %v579
        %vm581 = vsmask.f32 4352
        %v582 = vrot.slane %v467, 3
        %v583 = vrot.slane %v469, 4
        %v584 = vor.u32 %v582, %v583
        %v585 = vrot.slane %v478, 3
        %v586 = vrot.slane %v474, 4
        %v587 = vor.u32 %v585, %v586
        %v588 = vsel %vm581, %v584, %v587
        %v589 = vrot.slane %v486, 3
        %v590 = vrot.slane %v482, 4
        %v591 = vor.u32 %v589, %v590
        %v592 = vsel %vm581, %v587, %v591
        %v593 = vrot.slane %v494, 3
        %v594 = vrot.slane %v490, 4
        %v595 = vor.u32 %v593, %v594
        %v596 = vsel %vm581, %v591, %v595
        %597 = vrot.lane.b32.xlu0 %v588, 64
        %v598 = vpop.permute.xlu0 %597
        %599 = vrot.lane.b32.xlu0 %v592, 64
        %v600 = vpop.permute.xlu0 %599
        %601 = vrot.lane.b32.xlu0 %v596, 64
        %v602 = vpop.permute.xlu0 %601
        %603 = vrot.lane.b32.xlu0 %v595, 64
        %v604 = vpop.permute.xlu0 %603
        %vm605 = vcmask 1043456
        %v606 = vrot.slane %v388, 4
        %v607 = vrot.slane %v389, 4
        %v608 = vsel %vm605, %v606, %v607
        %v609 = vrot.slane %v390, 4
        %v610 = vsel %vm605, %v607, %v609
        %v611 = vrot.slane %v391, 4
        %v612 = vsel %vm605, %v609, %v611
        %vm613 = vcmask 523264
        %v615 = vsel %vm613, %v388, %v498
        %v617 = vsel %vm613, %v389, %v500
        %v619 = vsel %vm613, %v390, %v502
        %v621 = vsel %vm613, %v391, %v504
        %v624 = vsel %vm613, %v512, %v534
        %v627 = vsel %vm613, %v514, %v536
        %v630 = vsel %vm613, %v516, %v538
        %v633 = vsel %vm613, %v515, %v540
        %v636 = vsel %vm613, %v544, %v566
        %v639 = vsel %vm613, %v546, %v568
        %v642 = vsel %vm613, %v548, %v570
        %v645 = vsel %vm613, %v547, %v572
        %v648 = vsel %vm613, %v576, %v598
        %v651 = vsel %vm613, %v578, %v600
        %v654 = vsel %vm613, %v580, %v602
        %v657 = vsel %vm613, %v579, %v604
        %v659 = vlaneseq
        %v660 = vshrl.u32 %v659, 7
        %v661 = vsub.s32 0, %v660
        %v662 = vrot.slane %v464, %v661
        %v664 = vshrl.u32 %v615, 16
        %v666 = vshll.u32 %v615, 16
        %v668 = vrot.slane %v666, 1
        %v669 = vor.u32 %v664, %v668
        %v670 = vshll.u32 %v617, 16
        %v672 = vrot.slane %v670, 1
        %v673 = vsel %vm465, %v669, %v672
        %v674 = vshrl.u32 %v624, 16
        %v676 = vshll.u32 %v624, 16
        %v678 = vrot.slane %v676, 1
        %v679 = vor.u32 %v674, %v678
        %v680 = vshll.u32 %v627, 16
        %v682 = vrot.slane %v680, 1
        %v683 = vsel %vm465, %v679, %v682
        %v684 = vshrl.u32 %v636, 16
        %v686 = vshll.u32 %v636, 16
        %v688 = vrot.slane %v686, 1
        %v689 = vor.u32 %v684, %v688
        %v690 = vshll.u32 %v639, 16
        %v692 = vrot.slane %v690, 1
        %v693 = vsel %vm465, %v689, %v692
        %v694 = vshrl.u32 %v648, 16
        %v696 = vshll.u32 %v648, 16
        %v698 = vrot.slane %v696, 1
        %v699 = vor.u32 %v694, %v698
        %v700 = vshll.u32 %v651, 16
        %v702 = vrot.slane %v700, 1
        %v703 = vsel %vm465, %v699, %v702
        %v705 = vshrl.u32 %v608, 16
        %v707 = vshll.u32 %v608, 16
        %v709 = vrot.slane %v707, 1
        %v710 = vor.u32 %v705, %v709
        %v712 = vshll.u32 %v610, 16
        %v714 = vrot.slane %v712, 1
        %v715 = vsel %vm465, %v710, %v714
        %v716 = vshrl.u32 %v617, 16
        %v718 = vor.u32 %v716, %v672
        %v719 = vshll.u32 %v619, 16
        %v721 = vrot.slane %v719, 1
        %v722 = vsel %vm465, %v718, %v721
        %v723 = vshrl.u32 %v627, 16
        %v725 = vor.u32 %v723, %v682
        %v726 = vshll.u32 %v630, 16
        %v728 = vrot.slane %v726, 1
        %v729 = vsel %vm465, %v725, %v728
        %v730 = vshrl.u32 %v639, 16
        %v732 = vor.u32 %v730, %v692
        %v733 = vshll.u32 %v642, 16
        %v735 = vrot.slane %v733, 1
        %v736 = vsel %vm465, %v732, %v735
        %v737 = vshrl.u32 %v651, 16
        %v739 = vor.u32 %v737, %v702
        %v740 = vshll.u32 %v654, 16
        %v742 = vrot.slane %v740, 1
        %v743 = vsel %vm465, %v739, %v742
        %v744 = vshrl.u32 %v610, 16
        %v746 = vor.u32 %v744, %v714
        %v748 = vshll.u32 %v612, 16
        %v750 = vrot.slane %v748, 1
        %v751 = vsel %vm465, %v746, %v750
        %v752 = vshrl.u32 %v619, 16
        %v754 = vor.u32 %v752, %v721
        %v755 = vshll.u32 %v621, 16
        %v757 = vrot.slane %v755, 1
        %v758 = vsel %vm465, %v754, %v757
        %v759 = vshrl.u32 %v630, 16
        %v761 = vor.u32 %v759, %v728
        %v762 = vshll.u32 %v633, 16
        %v764 = vrot.slane %v762, 1
        %v765 = vsel %vm465, %v761, %v764
        %v766 = vshrl.u32 %v642, 16
        %v768 = vor.u32 %v766, %v735
        %v769 = vshll.u32 %v645, 16
        %v771 = vrot.slane %v769, 1
        %v772 = vsel %vm465, %v768, %v771
        %v773 = vshrl.u32 %v654, 16
        %v775 = vor.u32 %v773, %v742
        %v776 = vshll.u32 %v657, 16
        %v778 = vrot.slane %v776, 1
        %v779 = vsel %vm465, %v775, %v778
        %v780 = vshrl.u32 %v612, 16
        %v782 = vor.u32 %v780, %v750
        %v784 = vshll.u32 %v611, 16
        %v786 = vrot.slane %v784, 1
        %v787 = vsel %vm465, %v782, %v786
        %v788 = vshrl.u32 %v621, 16
        %v790 = vor.u32 %v788, %v757
        %v791 = vshrl.u32 %v633, 16
        %v793 = vor.u32 %v791, %v764
        %v794 = vshrl.u32 %v645, 16
        %v796 = vor.u32 %v794, %v771
        %v797 = vshrl.u32 %v657, 16
        %v799 = vor.u32 %v797, %v778
        %v800 = vshrl.u32 %v611, 16
        %v802 = vor.u32 %v800, %v786
        %v891 = vunpack.c.l.b16 %v392
        %v892 = vunpack.c.l.b16 %v393
        %v893 = vunpack.c.l.b16 %v394
        %v894 = vunpack.c.l.b16 %v395
        %v895 = vunpack.c.l.b16 %v396
        %v896 = vunpack.c.l.b16 %v397
        %v897 = vunpack.c.l.b16 %v398
        %v898 = vunpack.c.l.b16 %v399
        %v899 = vunpack.c.l.b16 %v400
        %v900 = vunpack.c.l.b16 %v401
        %v901 = vunpack.c.l.b16 %v402
        %v902 = vunpack.c.l.b16 %v403
        %v903 = vunpack.c.l.b16 %v404
        %v904 = vunpack.c.l.b16 %v405
        %v905 = vunpack.c.l.b16 %v406
        %v906 = vunpack.c.l.b16 %v407
        %v907 = vunpack.c.l.b16 %v408
        %v908 = vunpack.c.l.b16 %v409
        %v909 = vunpack.c.l.b16 %v410
        %v910 = vunpack.c.l.b16 %v411
        %v911 = vunpack.c.l.b16 %v412
        %v912 = vunpack.c.l.b16 %v413
        %v913 = vunpack.c.l.b16 %v414
        %v914 = vunpack.c.l.b16 %v415
        %v915 = vunpack.c.l.b16 %v416
        %v916 = vunpack.c.l.b16 %v417
        %v917 = vunpack.c.l.b16 %v418
        %v918 = vunpack.c.l.b16 %v419
        %v919 = vunpack.c.l.b16 %v420
        %v920 = vunpack.c.l.b16 %v421
        %v921 = vunpack.c.l.b16 %v422
        %v922 = vunpack.c.l.b16 %v423
        %v923 = vunpack.c.l.b16 %v424
        %v924 = vunpack.c.l.b16 %v425
        %v925 = vunpack.c.l.b16 %v426
        %v926 = vunpack.c.l.b16 %v427
        %v927 = vunpack.c.l.b16 %v428
        %v928 = vunpack.c.l.b16 %v429
        %v929 = vunpack.c.l.b16 %v430
        %v930 = vunpack.c.l.b16 %v431
        %v931 = vunpack.c.l.b16 %v432
        %v932 = vunpack.c.l.b16 %v433
        %v933 = vunpack.c.l.b16 %v434
        %v934 = vunpack.c.l.b16 %v435
        %v935 = vunpack.c.l.b16 %v436
        %v936 = vunpack.c.l.b16 %v437
        %v937 = vunpack.c.l.b16 %v438
        %v938 = vunpack.c.l.b16 %v439
        %v939 = vunpack.c.l.b16 %v440
        %v940 = vunpack.c.l.b16 %v441
        %v941 = vunpack.c.l.b16 %v442
        %v942 = vunpack.c.l.b16 %v443
        %v943 = vunpack.c.l.b16 %v444
        %v944 = vunpack.c.l.b16 %v445
        %v945 = vunpack.c.l.b16 %v446
        %v946 = vunpack.c.l.b16 %v447
        %v947 = vunpack.c.l.b16 %v448
        %v948 = vunpack.c.l.b16 %v449
        %v949 = vunpack.c.l.b16 %v450
        %v950 = vunpack.c.l.b16 %v451
        %v951 = vunpack.c.l.b16 %v452
        %v952 = vunpack.c.l.b16 %v453
        %v953 = vunpack.c.l.b16 %v454
        %v954 = vunpack.c.l.b16 %v455
        %v955 = vunpack.c.l.b16 %v456
        %v956 = vunpack.c.l.b16 %v457
        %v957 = vunpack.c.l.b16 %v458
        %v958 = vunpack.c.l.b16 %v459
        %v959 = vunpack.c.l.b16 %v460
        %v960 = vunpack.c.l.b16 %v461
        %v961 = vunpack.c.l.b16 %v462
        %v962 = vunpack.c.l.b16 %v463
        %v963 = vpack.c.b16 %v892, %v891
        %v964 = vpack.c.b16 %v894, %v893
        %v965 = vpack.c.b16 %v896, %v895
        %v966 = vpack.c.b16 %v898, %v897
        %v967 = vpack.c.b16 %v900, %v899
        %v968 = vpack.c.b16 %v902, %v901
        %v969 = vpack.c.b16 %v904, %v903
        %v970 = vpack.c.b16 %v906, %v905
        %v971 = vpack.c.b16 %v908, %v907
        %v972 = vpack.c.b16 %v910, %v909
        %v973 = vpack.c.b16 %v912, %v911
        %v974 = vpack.c.b16 %v914, %v913
        %v975 = vpack.c.b16 %v916, %v915
        %v976 = vpack.c.b16 %v918, %v917
        %v977 = vpack.c.b16 %v920, %v919
        %v978 = vpack.c.b16 %v922, %v921
        %v979 = vpack.c.b16 %v924, %v923
        %v980 = vpack.c.b16 %v926, %v925
        %v981 = vpack.c.b16 %v928, %v927
        %v982 = vpack.c.b16 %v930, %v929
        %v983 = vpack.c.b16 %v932, %v931
        %v984 = vpack.c.b16 %v934, %v933
        %v985 = vpack.c.b16 %v936, %v935
        %v986 = vpack.c.b16 %v938, %v937
        %v987 = vpack.c.b16 %v940, %v939
        %v988 = vpack.c.b16 %v942, %v941
        %v989 = vpack.c.b16 %v944, %v943
        %v990 = vpack.c.b16 %v946, %v945
        %v991 = vpack.c.b16 %v948, %v947
        %v992 = vpack.c.b16 %v950, %v949
        %v993 = vpack.c.b16 %v952, %v951
        %v994 = vpack.c.b16 %v954, %v953
        %v995 = vpack.c.b16 %v956, %v955
        %v996 = vpack.c.b16 %v958, %v957
        %v997 = vpack.c.b16 %v960, %v959
        %v998 = vpack.c.b16 %v962, %v961
        %v1036 = vsel %vm613, %v715, 0
        %v1039 = vsel %vm613, %v751, 0
        %v1042 = vsel %vm613, %v787, 0
        %v1045 = vsel %vm613, %v802, 0
        %1047 = vmatprep.subr.bf16.mxu0 0
        %1048 = vmatpush1.bf16.msra.mxu0 %v963
        %1049 = vmatprep.subr.bf16.mxu0 0
        %1050 = vmatpush1.bf16.msra.mxu0 %v964
        %1051 = vmatprep.subr.bf16.mxu0 0
        %1052 = vmatpush1.bf16.msra.mxu0 %v965
        %1053 = vmatprep.subr.bf16.mxu0 0
        %1054 = vmatpush1.bf16.msra.mxu0 %v966
        %1055 = vmatprep.subr.bf16.mxu0 0
        %1056 = vmatpush1.bf16.msra.mxu0 %v967
        %1057 = vmatprep.subr.bf16.mxu0 0
        %1058 = vmatpush1.bf16.msra.mxu0 %v968
        %1059 = vmatprep.subr.bf16.mxu0 0
        %1060 = vmatpush1.bf16.msra.mxu0 %v969
        %1061 = vmatprep.subr.bf16.mxu0 0
        %1062 = vmatpush1.bf16.msra.mxu0 %v970
        %1063 = vmatprep.subr.bf16.mxu0 0
        %1064 = vmatpush1.bf16.msra.mxu0 %v971
        %1065 = vmatprep.subr.bf16.mxu0 0
        %1066 = vmatpush1.bf16.msra.mxu0 %v972
        %1067 = vmatprep.subr.bf16.mxu0 0
        %1068 = vmatpush1.bf16.msra.mxu0 %v973
        %1069 = vmatprep.subr.bf16.mxu0 0
        %1070 = vmatpush1.bf16.msra.mxu0 %v974
        %1071 = vmatprep.subr.bf16.mxu0 0
        %1072 = vmatpush1.bf16.msra.mxu0 %v975
        %1073 = vmatprep.subr.bf16.mxu0 0
        %1074 = vmatpush1.bf16.msra.mxu0 %v976
        %1075 = vmatprep.subr.bf16.mxu0 0
        %1076 = vmatpush1.bf16.msra.mxu0 %v977
        %1077 = vmatprep.subr.bf16.mxu0 0
        %1078 = vmatpush1.bf16.msra.mxu0 %v978
        %1079 = vmatprep.mubr.bf16.mxu0 %v683
        %1080 = vmatmul.mubr.bf16.gmra.mrb[0].mxu0 %v673
        %v1081 = vpop.f32.mrb[0].mxu0
        %v1082 = vadd.f32 %v662, %v1081
        %v1083 = vpop.f32.mrb[0].mxu0
        %v1084 = vpop.f32.mrb[0].mxu0
        %v1085 = vadd.f32 %v662, %v1084
        %v1086 = vpop.f32.mrb[0].mxu0
        %1087 = vmatprep.mubr.bf16.mxu0 %v729
        %1088 = vmatmul.mubr.bf16.gmra.mrb[0].mxu0 %v722
        %v1089 = vpop.f32.mrb[0].mxu0
        %v1090 = vadd.f32 %v662, %v1089
        %v1091 = vpop.f32.mrb[0].mxu0
        %v1092 = vpop.f32.mrb[0].mxu0
        %v1093 = vadd.f32 %v662, %v1092
        %v1094 = vpop.f32.mrb[0].mxu0
        %1095 = vmatprep.mubr.bf16.mxu0 %v765
        %1096 = vmatmul.mubr.bf16.gmra.mrb[0].mxu0 %v758
        %v1097 = vpop.f32.mrb[0].mxu0
        %v1098 = vadd.f32 %v662, %v1097
        %v1099 = vpop.f32.mrb[0].mxu0
        %v1100 = vpop.f32.mrb[0].mxu0
        %v1101 = vadd.f32 %v662, %v1100
        %v1102 = vpop.f32.mrb[0].mxu0
        %1103 = vmatprep.mubr.bf16.mxu0 %v793
        %1104 = vmatmul.mubr.bf16.gmra.mrb[0].mxu0 %v790
        %v1105 = vpop.f32.mrb[0].mxu0
        %v1106 = vadd.f32 %v662, %v1105
        %v1107 = vpop.f32.mrb[0].mxu0
        %v1108 = vpop.f32.mrb[0].mxu0
        %v1109 = vpop.f32.mrb[0].mxu0
        %1110 = vdwg.mxu0
        %1111 = vmatprep.subr.bf16.mxu0 0
        %1112 = vmatpush1.bf16.msra.mxu0 %v979
        %1113 = vmatprep.subr.bf16.mxu0 0
        %1114 = vmatpush1.bf16.msra.mxu0 %v980
        %1115 = vmatprep.subr.bf16.mxu0 0
        %1116 = vmatpush1.bf16.msra.mxu0 %v981
        %1117 = vmatprep.subr.bf16.mxu0 0
        %1118 = vmatpush1.bf16.msra.mxu0 %v982
        %1119 = vmatprep.subr.bf16.mxu0 0
        %1120 = vmatpush1.bf16.msra.mxu0 %v983
        %1121 = vmatprep.subr.bf16.mxu0 0
        %1122 = vmatpush1.bf16.msra.mxu0 %v984
        %1123 = vmatprep.subr.bf16.mxu0 0
        %1124 = vmatpush1.bf16.msra.mxu0 %v985
        %1125 = vmatprep.subr.bf16.mxu0 0
        %1126 = vmatpush1.bf16.msra.mxu0 %v986
        %1127 = vmatprep.subr.bf16.mxu0 0
        %1128 = vmatpush1.bf16.msra.mxu0 %v987
        %1129 = vmatprep.subr.bf16.mxu0 0
        %1130 = vmatpush1.bf16.msra.mxu0 %v988
        %1131 = vmatprep.subr.bf16.mxu0 0
        %1132 = vmatpush1.bf16.msra.mxu0 %v989
        %1133 = vmatprep.subr.bf16.mxu0 0
        %1134 = vmatpush1.bf16.msra.mxu0 %v990
        %1135 = vmatprep.subr.bf16.mxu0 0
        %1136 = vmatpush1.bf16.msra.mxu0 %v991
        %1137 = vmatprep.subr.bf16.mxu0 0
        %1138 = vmatpush1.bf16.msra.mxu0 %v992
        %1139 = vmatprep.subr.bf16.mxu0 0
        %1140 = vmatpush1.bf16.msra.mxu0 %v993
        %1141 = vmatprep.subr.bf16.mxu0 0
        %1142 = vmatpush1.bf16.msra.mxu0 %v994
        %1143 = vmatprep.mubr.bf16.mxu0 %v703
        %1144 = vmatmul.mubr.bf16.gmra.mrb[0].mxu0 %v693
        %v1145 = vpop.f32.mrb[0].mxu0
        %v1146 = vadd.f32 %v1082, %v1145
        %v1147 = vpop.f32.mrb[0].mxu0
        %v1148 = vpop.f32.mrb[0].mxu0
        %v1149 = vadd.f32 %v1085, %v1148
        %v1150 = vpop.f32.mrb[0].mxu0
        %1151 = vmatprep.mubr.bf16.mxu0 %v743
        %1152 = vmatmul.mubr.bf16.gmra.mrb[0].mxu0 %v736
        %v1153 = vpop.f32.mrb[0].mxu0
        %v1154 = vadd.f32 %v1090, %v1153
        %v1155 = vpop.f32.mrb[0].mxu0
        %v1156 = vpop.f32.mrb[0].mxu0
        %v1157 = vadd.f32 %v1093, %v1156
        %v1158 = vpop.f32.mrb[0].mxu0
        %1159 = vmatprep.mubr.bf16.mxu0 %v779
        %1160 = vmatmul.mubr.bf16.gmra.mrb[0].mxu0 %v772
        %v1161 = vpop.f32.mrb[0].mxu0
        %v1162 = vadd.f32 %v1098, %v1161
        %v1163 = vpop.f32.mrb[0].mxu0
        %v1164 = vpop.f32.mrb[0].mxu0
        %v1165 = vadd.f32 %v1101, %v1164
        %v1166 = vpop.f32.mrb[0].mxu0
        %1167 = vmatprep.mubr.bf16.mxu0 %v799
        %1168 = vmatmul.mubr.bf16.gmra.mrb[0].mxu0 %v796
        %v1169 = vpop.f32.mrb[0].mxu0
        %v1170 = vadd.f32 %v1106, %v1169
        %v1171 = vpop.f32.mrb[0].mxu0
        %v1172 = vpop.f32.mrb[0].mxu0
        %v1173 = vpop.f32.mrb[0].mxu0
        %1174 = vdwg.mxu0
        %1175 = vmatprep.subr.bf16.mxu0 0
        %1176 = vmatpush1.bf16.msra.mxu0 %v995
        %1177 = vmatprep.subr.bf16.mxu0 0
        %1178 = vmatpush1.bf16.msra.mxu0 %v996
        %1179 = vmatprep.subr.bf16.mxu0 0
        %1180 = vmatpush1.bf16.msra.mxu0 %v997
        %1181 = vmatprep.subr.bf16.mxu0 0
        %1182 = vmatpush1.bf16.msra.mxu0 %v998
        %1183 = vmatprep.subr.bf16.mxu0 0
        %1184 = vmatpush1.bf16.msra.mxu0 0
        %1185 = vmatprep.subr.bf16.mxu0 0
        %1186 = vmatpush1.bf16.msra.mxu0 0
        %1187 = vmatprep.subr.bf16.mxu0 0
        %1188 = vmatpush1.bf16.msra.mxu0 0
        %1189 = vmatprep.subr.bf16.mxu0 0
        %1190 = vmatpush1.bf16.msra.mxu0 0
        %1191 = vmatprep.subr.bf16.mxu0 0
        %1192 = vmatpush1.bf16.msra.mxu0 0
        %1193 = vmatprep.subr.bf16.mxu0 0
        %1194 = vmatpush1.bf16.msra.mxu0 0
        %1195 = vmatprep.subr.bf16.mxu0 0
        %1196 = vmatpush1.bf16.msra.mxu0 0
        %1197 = vmatprep.subr.bf16.mxu0 0
        %1198 = vmatpush1.bf16.msra.mxu0 0
        %1199 = vmatprep.subr.bf16.mxu0 0
        %1200 = vmatpush1.bf16.msra.mxu0 0
        %1201 = vmatprep.subr.bf16.mxu0 0
        %1202 = vmatpush1.bf16.msra.mxu0 0
        %1203 = vmatprep.subr.bf16.mxu0 0
        %1204 = vmatpush1.bf16.msra.mxu0 0
        %1205 = vmatprep.subr.bf16.mxu0 0
        %1206 = vmatpush1.bf16.msra.mxu0 0
        %1207 = vmatprep.mubr.bf16.mxu0 0
        %1208 = vmatmul.mubr.bf16.gmra.mrb[0].mxu0 %v1036
        %v1209 = vpop.f32.mrb[0].mxu0
        %v1210 = vadd.f32 %v1146, %v1209
        %v1211 = vpop.f32.mrb[0].mxu0
        %v1212 = vpop.f32.mrb[0].mxu0
        %v1213 = vadd.f32 %v1149, %v1212
        %v1214 = vpop.f32.mrb[0].mxu0
        %1215 = vmatprep.mubr.bf16.mxu0 0
        %1216 = vmatmul.mubr.bf16.gmra.mrb[0].mxu0 %v1039
        %v1217 = vpop.f32.mrb[0].mxu0
        %v1218 = vadd.f32 %v1154, %v1217
        %v1219 = vpop.f32.mrb[0].mxu0
        %v1220 = vpop.f32.mrb[0].mxu0
        %v1221 = vadd.f32 %v1157, %v1220
        %v1222 = vpop.f32.mrb[0].mxu0
        %1223 = vmatprep.mubr.bf16.mxu0 0
        %1224 = vmatmul.mubr.bf16.gmra.mrb[0].mxu0 %v1042
        %v1225 = vpop.f32.mrb[0].mxu0
        %v1226 = vadd.f32 %v1162, %v1225
        %v1227 = vpop.f32.mrb[0].mxu0
        %v1228 = vpop.f32.mrb[0].mxu0
        %v1229 = vadd.f32 %v1165, %v1228
        %v1230 = vpop.f32.mrb[0].mxu0
        %1231 = vmatprep.mubr.bf16.mxu0 0
        %1232 = vmatmul.mubr.bf16.gmra.mrb[0].mxu0 %v1045
        %v1233 = vpop.f32.mrb[0].mxu0
        %v1234 = vadd.f32 %v1170, %v1233
        %v1235 = vpop.f32.mrb[0].mxu0
        %v1236 = vpop.f32.mrb[0].mxu0
        %v1237 = vpop.f32.mrb[0].mxu0
        %1238 = vdwg.mxu0
        %v1239 = vmax.f32 %v1210, 0.0
        %v1240 = vmax.f32 %v1213, 0.0
        %v1241 = vmax.f32 %v1218, 0.0
        %v1242 = vmax.f32 %v1221, 0.0
        %v1243 = vmax.f32 %v1226, 0.0
        %v1244 = vmax.f32 %v1229, 0.0
        %v1245 = vmax.f32 %v1234, 0.0
        %v1246 = vlaneseq
        %v1247 = vshrl.u32 %v1246, 7
        %v1248 = vadd.s32 %v1247, 8
        %v1249 = vadd.s32 %v1247, 16
        %v1250 = vadd.s32 %v1247, 24
        %v1251 = vadd.s32 %v1247, 32
        %v1252 = vadd.s32 %v1247, 40
        %v1253 = vadd.s32 %v1247, 48
        %v1254 = vstv %s379
        %v1255 = vadd.s32 %v1254, %v1247
        %v1256 = vadd.s32 %v1254, %v1248
        %v1257 = vadd.s32 %v1254, %v1249
        %v1258 = vadd.s32 %v1254, %v1250
        %v1259 = vadd.s32 %v1254, %v1251
        %v1260 = vadd.s32 %v1254, %v1252
        %v1261 = vadd.s32 %v1254, %v1253
        %v1262 = vadd.s32 %v1255, 4294967293
        %v1263 = vadd.s32 %v1256, 4294967293
        %v1264 = vadd.s32 %v1257, 4294967293
        %v1265 = vadd.s32 %v1258, 4294967293
        %v1266 = vadd.s32 %v1259, 4294967293
        %v1267 = vadd.s32 %v1260, 4294967293
        %v1268 = vadd.s32 %v1261, 4294967293
        %vm1269 = vcmp.ge.s32.totalorder %v1262, 0
        %vm1270 = vcmp.ge.s32.totalorder %v1263, 0
        %vm1271 = vcmp.ge.s32.totalorder %v1264, 0
        %vm1272 = vcmp.ge.s32.totalorder %v1265, 0
        %vm1273 = vcmp.ge.s32.totalorder %v1266, 0
        %vm1274 = vcmp.ge.s32.totalorder %v1267, 0
        %vm1275 = vcmp.ge.s32.totalorder %v1268, 0
        %vm1276 = vcmp.lt.s32.totalorder %v1262, 48
        %vm1277 = vcmp.lt.s32.totalorder %v1263, 48
        %vm1278 = vcmp.lt.s32.totalorder %v1264, 48
        %vm1279 = vcmp.lt.s32.totalorder %v1265, 48
        %vm1280 = vcmp.lt.s32.totalorder %v1266, 48
        %vm1281 = vcmp.lt.s32.totalorder %v1267, 48
        %vm1282 = vcmp.lt.s32.totalorder %v1268, 48
        %vm1283 = vmand %vm1269, %vm1276
        %vm1284 = vmand %vm1270, %vm1277
        %vm1285 = vmand %vm1271, %vm1278
        %vm1286 = vmand %vm1272, %vm1279
        %vm1287 = vmand %vm1273, %vm1280
        %vm1288 = vmand %vm1274, %vm1281
        %vm1289 = vmand %vm1275, %vm1282
        %v1290 = vsel %vm1283, 1, 0
        %v1291 = vsel %vm1284, 1, 0
        %v1292 = vsel %vm1285, 1, 0
        %v1293 = vsel %vm1286, 1, 0
        %v1294 = vsel %vm1287, 1, 0
        %v1295 = vsel %vm1288, 1, 0
        %v1296 = vsel %vm1289, 1, 0
        %vm1297 = vcmp.eq.s32.totalorder %v1290, 1
        %vm1298 = vcmp.eq.s32.totalorder %v1291, 1
        %vm1299 = vcmp.eq.s32.totalorder %v1292, 1
        %vm1300 = vcmp.eq.s32.totalorder %v1293, 1
        %vm1301 = vcmp.eq.s32.totalorder %v1294, 1
        %vm1302 = vcmp.eq.s32.totalorder %v1295, 1
        %vm1303 = vcmp.eq.s32.totalorder %v1296, 1
        %v1304 = vsel %vm1297, %v1239, 0.0
        %v1305 = vsel %vm1298, %v1240, 0.0
        %v1306 = vsel %vm1299, %v1241, 0.0
        %v1307 = vsel %vm1300, %v1242, 0.0
        %v1308 = vsel %vm1301, %v1243, 0.0
        %v1309 = vsel %vm1302, %v1244, 0.0
        %v1310 = vsel %vm1303, %v1245, 0.0
        %v1311 = vpack.c.bf16 %v1305, %v1304
        %v1312 = vpack.c.bf16 %v1307, %v1306
        %v1313 = vpack.c.bf16 %v1309, %v1308
        %v1314 = vpack.c.bf16 %v1310, %v1310
        %v1315 = vld [vmem:[%s4] sm:$0xf]
        %v1316 = vld [vmem:[%s4 + $0x4] sm:$0xf]
        %v1317 = vld [vmem:[%s4 + $0x8] sm:$0xf]
        %v1318 = vld [vmem:[%s4 + $0xc] sm:$0xf]
        %v1319 = vld [vmem:[%s4 + $0x10] sm:$0xf]
        %v1320 = vld [vmem:[%s4 + $0x14] sm:$0xf]
        %v1321 = vld [vmem:[%s4 + $0x18] sm:$0xf]
        %v1322 = vld [vmem:[%s4 + $0x1c] sm:$0xf]
        %v1323 = vld [vmem:[%s4 + $0x20] sm:$0xf]
        %v1324 = vld [vmem:[%s4 + $0x24] sm:$0xf]
        %v1325 = vld [vmem:[%s4 + $0x28] sm:$0xf]
        %v1326 = vld [vmem:[%s4 + $0x2c] sm:$0xf]
        %v1327 = vld [vmem:[%s4 + $0x30] sm:$0xf]
        %v1328 = vld [vmem:[%s4 + $0x34] sm:$0xf]
        %v1329 = vld [vmem:[%s4 + $0x38] sm:$0xf]
        %v1330 = vld [vmem:[%s4 + $0x3c] sm:$0xf]
        %v1331 = vld [vmem:[%s4 + $0x40] sm:$0xf]
        %v1332 = vld [vmem:[%s4 + $0x44] sm:$0xf]
        %v1333 = vld [vmem:[%s4 + $0x48] sm:$0xf]
        %v1334 = vld [vmem:[%s4 + $0x4c] sm:$0xf]
        %v1335 = vld [vmem:[%s4 + $0x50] sm:$0xf]
        %v1336 = vld [vmem:[%s4 + $0x54] sm:$0xf]
        %v1337 = vld [vmem:[%s4 + $0x58] sm:$0xf]
        %v1338 = vld [vmem:[%s4 + $0x5c] sm:$0xf]
        %v1339 = vld [vmem:[%s4 + $0x60] sm:$0xf]
        %v1340 = vld [vmem:[%s4 + $0x64] sm:$0xf]
        %v1341 = vld [vmem:[%s4 + $0x68] sm:$0xf]
        %v1342 = vld [vmem:[%s4 + $0x6c] sm:$0xf]
        %v1343 = vld [vmem:[%s4 + $0x70] sm:$0xf]
        %v1344 = vld [vmem:[%s4 + $0x74] sm:$0xf]
        %v1345 = vld [vmem:[%s4 + $0x78] sm:$0xf]
        %v1346 = vld [vmem:[%s4 + $0x7c] sm:$0xf]
        %v1347 = vld [vmem:[%s4 + $0x80] sm:$0xf]
        %v1348 = vld [vmem:[%s4 + $0x84] sm:$0xf]
        %v1349 = vld [vmem:[%s4 + $0x88] sm:$0xf]
        %v1350 = vld [vmem:[%s4 + $0x8c] sm:$0xf]
        %v1351 = vld [vmem:[%s4 + $0x90] sm:$0xf]
        %v1352 = vld [vmem:[%s4 + $0x94] sm:$0xf]
        %v1353 = vld [vmem:[%s4 + $0x98] sm:$0xf]
        %v1354 = vld [vmem:[%s4 + $0x9c] sm:$0xf]
        %v1355 = vld [vmem:[%s4 + $0xa0] sm:$0xf]
        %v1356 = vld [vmem:[%s4 + $0xa4] sm:$0xf]
        %v1357 = vld [vmem:[%s4 + $0xa8] sm:$0xf]
        %v1358 = vld [vmem:[%s4 + $0xac] sm:$0xf]
        %v1359 = vld [vmem:[%s4 + $0xb0] sm:$0xf]
        %v1360 = vld [vmem:[%s4 + $0xb4] sm:$0xf]
        %v1361 = vld [vmem:[%s4 + $0xb8] sm:$0xf]
        %v1362 = vld [vmem:[%s4 + $0xbc] sm:$0xf]
        %v1363 = vld [vmem:[%s4 + $0xc0] sm:$0xf]
        %v1364 = vld [vmem:[%s4 + $0xc4] sm:$0xf]
        %v1365 = vld [vmem:[%s4 + $0xc8] sm:$0xf]
        %v1366 = vld [vmem:[%s4 + $0xcc] sm:$0xf]
        %v1367 = vld [vmem:[%s4 + $0xd0] sm:$0xf]
        %v1368 = vld [vmem:[%s4 + $0xd4] sm:$0xf]
        %v1369 = vld [vmem:[%s4 + $0xd8] sm:$0xf]
        %v1370 = vld [vmem:[%s4 + $0xdc] sm:$0xf]
        %v1371 = vld [vmem:[%s4 + $0xe0] sm:$0xf]
        %v1372 = vld [vmem:[%s4 + $0xe4] sm:$0xf]
        %v1373 = vld [vmem:[%s4 + $0xe8] sm:$0xf]
        %v1374 = vld [vmem:[%s4 + $0xec] sm:$0xf]
        %v1375 = vld [vmem:[%s4 + $0xf0] sm:$0xf]
        %v1376 = vld [vmem:[%s4 + $0xf4] sm:$0xf]
        %v1377 = vld [vmem:[%s4 + $0xf8] sm:$0xf]
        %v1378 = vld [vmem:[%s4 + $0xfc] sm:$0xf]
        %v1379 = vld [vmem:[%s4 + $0x100] sm:$0xf]
        %v1380 = vld [vmem:[%s4 + $0x104] sm:$0xf]
        %v1381 = vld [vmem:[%s4 + $0x108] sm:$0xf]
        %v1382 = vld [vmem:[%s4 + $0x10c] sm:$0xf]
        %v1383 = vld [vmem:[%s4 + $0x110] sm:$0xf]
        %v1384 = vld [vmem:[%s4 + $0x114] sm:$0xf]
        %v1385 = vld [vmem:[%s4 + $0x118] sm:$0xf]
        %v1386 = vld [vmem:[%s4 + $0x11c] sm:$0xf]
        %v1387 = vld [vmem:[%s4 + $0x120] sm:$0xf]
        %v1388 = vld [vmem:[%s4 + $0x124] sm:$0xf]
        %v1389 = vld [vmem:[%s4 + $0x128] sm:$0xf]
        %v1390 = vld [vmem:[%s4 + $0x12c] sm:$0xf]
        %v1391 = vld [vmem:[%s4 + $0x130] sm:$0xf]
        %v1392 = vld [vmem:[%s4 + $0x134] sm:$0xf]
        %v1393 = vld [vmem:[%s4 + $0x138] sm:$0xf]
        %v1394 = vld [vmem:[%s4 + $0x13c] sm:$0xf]
        %v1395 = vld [vmem:[%s5] sm:$0x1]
        %v1397 = vshrl.u32 %v1311, 16
        %v1399 = vshll.u32 %v1311, 16
        %v1401 = vrot.slane %v1399, 1
        %v1402 = vor.u32 %v1397, %v1401
        %v1404 = vshll.u32 %v1312, 16
        %v1406 = vrot.slane %v1404, 1
        %v1407 = vsel %vm465, %v1402, %v1406
        %v1408 = vshrl.u32 %v1312, 16
        %v1410 = vor.u32 %v1408, %v1406
        %v1412 = vshll.u32 %v1313, 16
        %v1414 = vrot.slane %v1412, 1
        %v1415 = vsel %vm465, %v1410, %v1414
        %v1416 = vshrl.u32 %v1313, 16
        %v1418 = vor.u32 %v1416, %v1414
        %v1420 = vshll.u32 %v1314, 16
        %v1422 = vrot.slane %v1420, 1
        %v1423 = vsel %vm465, %v1418, %v1422
        %v1424 = vshrl.u32 %v1314, 16
        %v1426 = vor.u32 %v1424, %v1422
        %v1435 = vrot.slane %v1311, 1
        %v1436 = vrot.slane %v1312, 1
        %v1437 = vsel %vm509, %v1435, %v1436
        %v1438 = vrot.slane %v1313, 1
        %v1439 = vsel %vm509, %v1436, %v1438
        %v1440 = vrot.slane %v1314, 1
        %v1441 = vsel %vm509, %v1438, %v1440
        %v1446 = vrot.slane %v1397, 1
        %v1447 = vrot.slane %v1399, 2
        %v1448 = vor.u32 %v1446, %v1447
        %v1449 = vrot.slane %v1408, 1
        %v1450 = vrot.slane %v1404, 2
        %v1451 = vor.u32 %v1449, %v1450
        %v1452 = vsel %vm517, %v1448, %v1451
        %v1453 = vrot.slane %v1416, 1
        %v1454 = vrot.slane %v1412, 2
        %v1455 = vor.u32 %v1453, %v1454
        %v1456 = vsel %vm517, %v1451, %v1455
        %v1457 = vrot.slane %v1424, 1
        %v1458 = vrot.slane %v1420, 2
        %v1459 = vor.u32 %v1457, %v1458
        %v1460 = vsel %vm517, %v1455, %v1459
        %v1465 = vrot.slane %v1311, 2
        %v1466 = vrot.slane %v1312, 2
        %v1467 = vsel %vm541, %v1465, %v1466
        %v1468 = vrot.slane %v1313, 2
        %v1469 = vsel %vm541, %v1466, %v1468
        %v1470 = vrot.slane %v1314, 2
        %v1471 = vsel %vm541, %v1468, %v1470
        %v1477 = vlaneseq
        %v1478 = vshrl.u32 %v1477, 7
        %v1479 = vsub.s32 0, %v1478
        %v1480 = vrot.slane %v1395, %v1479
        %v1562 = vunpack.c.l.b16 %v1315
        %v1563 = vunpack.c.l.b16 %v1316
        %v1564 = vunpack.c.l.b16 %v1317
        %v1565 = vunpack.c.l.b16 %v1318
        %v1566 = vunpack.c.l.b16 %v1319
        %v1567 = vunpack.c.l.b16 %v1320
        %v1568 = vunpack.c.l.b16 %v1321
        %v1569 = vunpack.c.l.b16 %v1322
        %v1570 = vunpack.c.l.b16 %v1323
        %v1571 = vunpack.c.l.b16 %v1324
        %v1572 = vunpack.c.l.b16 %v1325
        %v1573 = vunpack.c.l.b16 %v1326
        %v1574 = vunpack.c.l.b16 %v1327
        %v1575 = vunpack.c.l.b16 %v1328
        %v1576 = vunpack.c.l.b16 %v1329
        %v1577 = vunpack.c.l.b16 %v1330
        %v1578 = vunpack.c.l.b16 %v1331
        %v1579 = vunpack.c.l.b16 %v1332
        %v1580 = vunpack.c.l.b16 %v1333
        %v1581 = vunpack.c.l.b16 %v1334
        %v1582 = vunpack.c.l.b16 %v1335
        %v1583 = vunpack.c.l.b16 %v1336
        %v1584 = vunpack.c.l.b16 %v1337
        %v1585 = vunpack.c.l.b16 %v1338
        %v1586 = vunpack.c.l.b16 %v1339
        %v1587 = vunpack.c.l.b16 %v1340
        %v1588 = vunpack.c.l.b16 %v1341
        %v1589 = vunpack.c.l.b16 %v1342
        %v1590 = vunpack.c.l.b16 %v1343
        %v1591 = vunpack.c.l.b16 %v1344
        %v1592 = vunpack.c.l.b16 %v1345
        %v1593 = vunpack.c.l.b16 %v1346
        %v1594 = vunpack.c.l.b16 %v1347
        %v1595 = vunpack.c.l.b16 %v1348
        %v1596 = vunpack.c.l.b16 %v1349
        %v1597 = vunpack.c.l.b16 %v1350
        %v1598 = vunpack.c.l.b16 %v1351
        %v1599 = vunpack.c.l.b16 %v1352
        %v1600 = vunpack.c.l.b16 %v1353
        %v1601 = vunpack.c.l.b16 %v1354
        %v1602 = vunpack.c.l.b16 %v1355
        %v1603 = vunpack.c.l.b16 %v1356
        %v1604 = vunpack.c.l.b16 %v1357
        %v1605 = vunpack.c.l.b16 %v1358
        %v1606 = vunpack.c.l.b16 %v1359
        %v1607 = vunpack.c.l.b16 %v1360
        %v1608 = vunpack.c.l.b16 %v1361
        %v1609 = vunpack.c.l.b16 %v1362
        %v1610 = vunpack.c.l.b16 %v1363
        %v1611 = vunpack.c.l.b16 %v1364
        %v1612 = vunpack.c.l.b16 %v1365
        %v1613 = vunpack.c.l.b16 %v1366
        %v1614 = vunpack.c.l.b16 %v1367
        %v1615 = vunpack.c.l.b16 %v1368
        %v1616 = vunpack.c.l.b16 %v1369
        %v1617 = vunpack.c.l.b16 %v1370
        %v1618 = vunpack.c.l.b16 %v1371
        %v1619 = vunpack.c.l.b16 %v1372
        %v1620 = vunpack.c.l.b16 %v1373
        %v1621 = vunpack.c.l.b16 %v1374
        %v1622 = vunpack.c.l.b16 %v1375
        %v1623 = vunpack.c.l.b16 %v1376
        %v1624 = vunpack.c.l.b16 %v1377
        %v1625 = vunpack.c.l.b16 %v1378
        %v1626 = vunpack.c.l.b16 %v1379
        %v1627 = vunpack.c.l.b16 %v1380
        %v1628 = vunpack.c.l.b16 %v1381
        %v1629 = vunpack.c.l.b16 %v1382
        %v1630 = vunpack.c.l.b16 %v1383
        %v1631 = vunpack.c.l.b16 %v1384
        %v1632 = vunpack.c.l.b16 %v1385
        %v1633 = vunpack.c.l.b16 %v1386
        %v1634 = vunpack.c.l.b16 %v1387
        %v1635 = vunpack.c.l.b16 %v1388
        %v1636 = vunpack.c.l.b16 %v1389
        %v1637 = vunpack.c.l.b16 %v1390
        %v1638 = vunpack.c.l.b16 %v1391
        %v1639 = vunpack.c.l.b16 %v1392
        %v1640 = vunpack.c.l.b16 %v1393
        %v1641 = vunpack.c.l.b16 %v1394
        %v1642 = vpack.c.b16 %v1563, %v1562
        %v1643 = vpack.c.b16 %v1565, %v1564
        %v1644 = vpack.c.b16 %v1567, %v1566
        %v1645 = vpack.c.b16 %v1569, %v1568
        %v1646 = vpack.c.b16 %v1571, %v1570
        %v1647 = vpack.c.b16 %v1573, %v1572
        %v1648 = vpack.c.b16 %v1575, %v1574
        %v1649 = vpack.c.b16 %v1577, %v1576
        %v1650 = vpack.c.b16 %v1579, %v1578
        %v1651 = vpack.c.b16 %v1581, %v1580
        %v1652 = vpack.c.b16 %v1583, %v1582
        %v1653 = vpack.c.b16 %v1585, %v1584
        %v1654 = vpack.c.b16 %v1587, %v1586
        %v1655 = vpack.c.b16 %v1589, %v1588
        %v1656 = vpack.c.b16 %v1591, %v1590
        %v1657 = vpack.c.b16 %v1593, %v1592
        %v1658 = vpack.c.b16 %v1595, %v1594
        %v1659 = vpack.c.b16 %v1597, %v1596
        %v1660 = vpack.c.b16 %v1599, %v1598
        %v1661 = vpack.c.b16 %v1601, %v1600
        %v1662 = vpack.c.b16 %v1603, %v1602
        %v1663 = vpack.c.b16 %v1605, %v1604
        %v1664 = vpack.c.b16 %v1607, %v1606
        %v1665 = vpack.c.b16 %v1609, %v1608
        %v1666 = vpack.c.b16 %v1611, %v1610
        %v1667 = vpack.c.b16 %v1613, %v1612
        %v1668 = vpack.c.b16 %v1615, %v1614
        %v1669 = vpack.c.b16 %v1617, %v1616
        %v1670 = vpack.c.b16 %v1619, %v1618
        %v1671 = vpack.c.b16 %v1621, %v1620
        %v1672 = vpack.c.b16 %v1623, %v1622
        %v1673 = vpack.c.b16 %v1625, %v1624
        %v1674 = vpack.c.b16 %v1627, %v1626
        %v1675 = vpack.c.b16 %v1629, %v1628
        %v1676 = vpack.c.b16 %v1631, %v1630
        %v1677 = vpack.c.b16 %v1633, %v1632
        %v1678 = vpack.c.b16 %v1635, %v1634
        %v1679 = vpack.c.b16 %v1637, %v1636
        %v1680 = vpack.c.b16 %v1639, %v1638
        %v1681 = vpack.c.b16 %v1641, %v1640
        %1722 = vmatprep.subr.bf16.mxu0 0
        %1723 = vmatpush1.bf16.msra.mxu0 %v1642
        %1724 = vmatprep.subr.bf16.mxu0 0
        %1725 = vmatpush1.bf16.msra.mxu0 %v1643
        %1726 = vmatprep.subr.bf16.mxu0 0
        %1727 = vmatpush1.bf16.msra.mxu0 %v1644
        %1728 = vmatprep.subr.bf16.mxu0 0
        %1729 = vmatpush1.bf16.msra.mxu0 %v1645
        %1730 = vmatprep.subr.bf16.mxu0 0
        %1731 = vmatpush1.bf16.msra.mxu0 %v1646
        %1732 = vmatprep.subr.bf16.mxu0 0
        %1733 = vmatpush1.bf16.msra.mxu0 %v1647
        %1734 = vmatprep.subr.bf16.mxu0 0
        %1735 = vmatpush1.bf16.msra.mxu0 %v1648
        %1736 = vmatprep.subr.bf16.mxu0 0
        %1737 = vmatpush1.bf16.msra.mxu0 %v1649
        %1738 = vmatprep.subr.bf16.mxu0 0
        %1739 = vmatpush1.bf16.msra.mxu0 %v1650
        %1740 = vmatprep.subr.bf16.mxu0 0
        %1741 = vmatpush1.bf16.msra.mxu0 %v1651
        %1742 = vmatprep.subr.bf16.mxu0 0
        %1743 = vmatpush1.bf16.msra.mxu0 %v1652
        %1744 = vmatprep.subr.bf16.mxu0 0
        %1745 = vmatpush1.bf16.msra.mxu0 %v1653
        %1746 = vmatprep.subr.bf16.mxu0 0
        %1747 = vmatpush1.bf16.msra.mxu0 %v1654
        %1748 = vmatprep.subr.bf16.mxu0 0
        %1749 = vmatpush1.bf16.msra.mxu0 %v1655
        %1750 = vmatprep.subr.bf16.mxu0 0
        %1751 = vmatpush1.bf16.msra.mxu0 %v1656
        %1752 = vmatprep.subr.bf16.mxu0 0
        %1753 = vmatpush1.bf16.msra.mxu0 %v1657
        %1754 = vmatprep.mubr.bf16.mxu0 %v1407
        %1755 = vmatmul.mubr.bf16.gmra.mrb[0].mxu0 %v1311
        %v1756 = vpop.f32.mrb[0].mxu0
        %v1757 = vadd.f32 %v1480, %v1756
        %v1758 = vpop.f32.mrb[0].mxu0
        %v1759 = vpop.f32.mrb[0].mxu0
        %v1760 = vadd.f32 %v1480, %v1759
        %v1761 = vpop.f32.mrb[0].mxu0
        %1762 = vmatprep.mubr.bf16.mxu0 %v1415
        %1763 = vmatmul.mubr.bf16.gmra.mrb[0].mxu0 %v1312
        %v1764 = vpop.f32.mrb[0].mxu0
        %v1765 = vadd.f32 %v1480, %v1764
        %v1766 = vpop.f32.mrb[0].mxu0
        %v1767 = vpop.f32.mrb[0].mxu0
        %v1768 = vadd.f32 %v1480, %v1767
        %v1769 = vpop.f32.mrb[0].mxu0
        %1770 = vmatprep.mubr.bf16.mxu0 %v1423
        %1771 = vmatmul.mubr.bf16.gmra.mrb[0].mxu0 %v1313
        %v1772 = vpop.f32.mrb[0].mxu0
        %v1773 = vadd.f32 %v1480, %v1772
        %v1774 = vpop.f32.mrb[0].mxu0
        %v1775 = vpop.f32.mrb[0].mxu0
        %v1776 = vadd.f32 %v1480, %v1775
        %v1777 = vpop.f32.mrb[0].mxu0
        %1778 = vmatprep.mubr.bf16.mxu0 %v1426
        %1779 = vmatmul.mubr.bf16.gmra.mrb[0].mxu0 %v1314
        %v1780 = vpop.f32.mrb[0].mxu0
        %v1781 = vadd.f32 %v1480, %v1780
        %v1782 = vpop.f32.mrb[0].mxu0
        %v1783 = vpop.f32.mrb[0].mxu0
        %v1784 = vpop.f32.mrb[0].mxu0
        %1785 = vdwg.mxu0
        %1786 = vmatprep.subr.bf16.mxu0 0
        %1787 = vmatpush1.bf16.msra.mxu0 %v1658
        %1788 = vmatprep.subr.bf16.mxu0 0
        %1789 = vmatpush1.bf16.msra.mxu0 %v1659
        %1790 = vmatprep.subr.bf16.mxu0 0
        %1791 = vmatpush1.bf16.msra.mxu0 %v1660
        %1792 = vmatprep.subr.bf16.mxu0 0
        %1793 = vmatpush1.bf16.msra.mxu0 %v1661
        %1794 = vmatprep.subr.bf16.mxu0 0
        %1795 = vmatpush1.bf16.msra.mxu0 %v1662
        %1796 = vmatprep.subr.bf16.mxu0 0
        %1797 = vmatpush1.bf16.msra.mxu0 %v1663
        %1798 = vmatprep.subr.bf16.mxu0 0
        %1799 = vmatpush1.bf16.msra.mxu0 %v1664
        %1800 = vmatprep.subr.bf16.mxu0 0
        %1801 = vmatpush1.bf16.msra.mxu0 %v1665
        %1802 = vmatprep.subr.bf16.mxu0 0
        %1803 = vmatpush1.bf16.msra.mxu0 %v1666
        %1804 = vmatprep.subr.bf16.mxu0 0
        %1805 = vmatpush1.bf16.msra.mxu0 %v1667
        %1806 = vmatprep.subr.bf16.mxu0 0
        %1807 = vmatpush1.bf16.msra.mxu0 %v1668
        %1808 = vmatprep.subr.bf16.mxu0 0
        %1809 = vmatpush1.bf16.msra.mxu0 %v1669
        %1810 = vmatprep.subr.bf16.mxu0 0
        %1811 = vmatpush1.bf16.msra.mxu0 %v1670
        %1812 = vmatprep.subr.bf16.mxu0 0
        %1813 = vmatpush1.bf16.msra.mxu0 %v1671
        %1814 = vmatprep.subr.bf16.mxu0 0
        %1815 = vmatpush1.bf16.msra.mxu0 %v1672
        %1816 = vmatprep.subr.bf16.mxu0 0
        %1817 = vmatpush1.bf16.msra.mxu0 %v1673
        %1818 = vmatprep.mubr.bf16.mxu0 %v1452
        %1819 = vmatmul.mubr.bf16.gmra.mrb[0].mxu0 %v1437
        %v1820 = vpop.f32.mrb[0].mxu0
        %v1821 = vadd.f32 %v1757, %v1820
        %v1822 = vpop.f32.mrb[0].mxu0
        %v1823 = vpop.f32.mrb[0].mxu0
        %v1824 = vadd.f32 %v1760, %v1823
        %v1825 = vpop.f32.mrb[0].mxu0
        %1826 = vmatprep.mubr.bf16.mxu0 %v1456
        %1827 = vmatmul.mubr.bf16.gmra.mrb[0].mxu0 %v1439
        %v1828 = vpop.f32.mrb[0].mxu0
        %v1829 = vadd.f32 %v1765, %v1828
        %v1830 = vpop.f32.mrb[0].mxu0
        %v1831 = vpop.f32.mrb[0].mxu0
        %v1832 = vadd.f32 %v1768, %v1831
        %v1833 = vpop.f32.mrb[0].mxu0
        %1834 = vmatprep.mubr.bf16.mxu0 %v1460
        %1835 = vmatmul.mubr.bf16.gmra.mrb[0].mxu0 %v1441
        %v1836 = vpop.f32.mrb[0].mxu0
        %v1837 = vadd.f32 %v1773, %v1836
        %v1838 = vpop.f32.mrb[0].mxu0
        %v1839 = vpop.f32.mrb[0].mxu0
        %v1840 = vadd.f32 %v1776, %v1839
        %v1841 = vpop.f32.mrb[0].mxu0
        %1842 = vmatprep.mubr.bf16.mxu0 %v1459
        %1843 = vmatmul.mubr.bf16.gmra.mrb[0].mxu0 %v1440
        %v1844 = vpop.f32.mrb[0].mxu0
        %v1845 = vadd.f32 %v1781, %v1844
        %v1846 = vpop.f32.mrb[0].mxu0
        %v1847 = vpop.f32.mrb[0].mxu0
        %v1848 = vpop.f32.mrb[0].mxu0
        %1849 = vdwg.mxu0
        %1850 = vmatprep.subr.bf16.mxu0 0
        %1851 = vmatpush1.bf16.msra.mxu0 %v1674
        %1852 = vmatprep.subr.bf16.mxu0 0
        %1853 = vmatpush1.bf16.msra.mxu0 %v1675
        %1854 = vmatprep.subr.bf16.mxu0 0
        %1855 = vmatpush1.bf16.msra.mxu0 %v1676
        %1856 = vmatprep.subr.bf16.mxu0 0
        %1857 = vmatpush1.bf16.msra.mxu0 %v1677
        %1858 = vmatprep.subr.bf16.mxu0 0
        %1859 = vmatpush1.bf16.msra.mxu0 %v1678
        %1860 = vmatprep.subr.bf16.mxu0 0
        %1861 = vmatpush1.bf16.msra.mxu0 %v1679
        %1862 = vmatprep.subr.bf16.mxu0 0
        %1863 = vmatpush1.bf16.msra.mxu0 %v1680
        %1864 = vmatprep.subr.bf16.mxu0 0
        %1865 = vmatpush1.bf16.msra.mxu0 %v1681
        %1866 = vmatprep.subr.bf16.mxu0 0
        %1867 = vmatpush1.bf16.msra.mxu0 0
        %1868 = vmatprep.subr.bf16.mxu0 0
        %1869 = vmatpush1.bf16.msra.mxu0 0
        %1870 = vmatprep.subr.bf16.mxu0 0
        %1871 = vmatpush1.bf16.msra.mxu0 0
        %1872 = vmatprep.subr.bf16.mxu0 0
        %1873 = vmatpush1.bf16.msra.mxu0 0
        %1874 = vmatprep.subr.bf16.mxu0 0
        %1875 = vmatpush1.bf16.msra.mxu0 0
        %1876 = vmatprep.subr.bf16.mxu0 0
        %1877 = vmatpush1.bf16.msra.mxu0 0
        %1878 = vmatprep.subr.bf16.mxu0 0
        %1879 = vmatpush1.bf16.msra.mxu0 0
        %1880 = vmatprep.subr.bf16.mxu0 0
        %1881 = vmatpush1.bf16.msra.mxu0 0
        %1882 = vmatprep.mubr.bf16.mxu0 0
        %1883 = vmatmul.mubr.bf16.gmra.mrb[0].mxu0 %v1467
        %v1884 = vpop.f32.mrb[0].mxu0
        %v1885 = vadd.f32 %v1821, %v1884
        %v1886 = vpop.f32.mrb[0].mxu0
        %v1887 = vpop.f32.mrb[0].mxu0
        %v1888 = vadd.f32 %v1824, %v1887
        %v1889 = vpop.f32.mrb[0].mxu0
        %1890 = vmatprep.mubr.bf16.mxu0 0
        %1891 = vmatmul.mubr.bf16.gmra.mrb[0].mxu0 %v1469
        %v1892 = vpop.f32.mrb[0].mxu0
        %v1893 = vadd.f32 %v1829, %v1892
        %v1894 = vpop.f32.mrb[0].mxu0
        %v1895 = vpop.f32.mrb[0].mxu0
        %v1896 = vadd.f32 %v1832, %v1895
        %v1897 = vpop.f32.mrb[0].mxu0
        %1898 = vmatprep.mubr.bf16.mxu0 0
        %1899 = vmatmul.mubr.bf16.gmra.mrb[0].mxu0 %v1471
        %v1900 = vpop.f32.mrb[0].mxu0
        %v1901 = vadd.f32 %v1837, %v1900
        %v1902 = vpop.f32.mrb[0].mxu0
        %v1903 = vpop.f32.mrb[0].mxu0
        %v1904 = vadd.f32 %v1840, %v1903
        %v1905 = vpop.f32.mrb[0].mxu0
        %1906 = vmatprep.mubr.bf16.mxu0 0
        %1907 = vmatmul.mubr.bf16.gmra.mrb[0].mxu0 %v1470
        %v1908 = vpop.f32.mrb[0].mxu0
        %v1909 = vadd.f32 %v1845, %v1908
        %v1910 = vpop.f32.mrb[0].mxu0
        %v1911 = vpop.f32.mrb[0].mxu0
        %v1912 = vpop.f32.mrb[0].mxu0
        %1913 = vdwg.mxu0
        %v1914 = vmax.f32 %v1885, 0.0
        %v1915 = vmax.f32 %v1888, 0.0
        %v1916 = vmax.f32 %v1893, 0.0
        %v1917 = vmax.f32 %v1896, 0.0
        %v1918 = vmax.f32 %v1901, 0.0
        %v1919 = vmax.f32 %v1904, 0.0
        %v1920 = vmax.f32 %v1909, 0.0
        %v1921 = vadd.s32 %v1255, 4294967295
        %v1922 = vadd.s32 %v1256, 4294967295
        %v1923 = vadd.s32 %v1257, 4294967295
        %v1924 = vadd.s32 %v1258, 4294967295
        %v1925 = vadd.s32 %v1259, 4294967295
        %v1926 = vadd.s32 %v1260, 4294967295
        %v1927 = vadd.s32 %v1261, 4294967295
        %vm1928 = vcmp.ge.s32.totalorder %v1921, 0
        %vm1929 = vcmp.ge.s32.totalorder %v1922, 0
        %vm1930 = vcmp.ge.s32.totalorder %v1923, 0
        %vm1931 = vcmp.ge.s32.totalorder %v1924, 0
        %vm1932 = vcmp.ge.s32.totalorder %v1925, 0
        %vm1933 = vcmp.ge.s32.totalorder %v1926, 0
        %vm1934 = vcmp.ge.s32.totalorder %v1927, 0
        %vm1935 = vcmp.lt.s32.totalorder %v1921, 48
        %vm1936 = vcmp.lt.s32.totalorder %v1922, 48
        %vm1937 = vcmp.lt.s32.totalorder %v1923, 48
        %vm1938 = vcmp.lt.s32.totalorder %v1924, 48
        %vm1939 = vcmp.lt.s32.totalorder %v1925, 48
        %vm1940 = vcmp.lt.s32.totalorder %v1926, 48
        %vm1941 = vcmp.lt.s32.totalorder %v1927, 48
        %vm1942 = vmand %vm1928, %vm1935
        %vm1943 = vmand %vm1929, %vm1936
        %vm1944 = vmand %vm1930, %vm1937
        %vm1945 = vmand %vm1931, %vm1938
        %vm1946 = vmand %vm1932, %vm1939
        %vm1947 = vmand %vm1933, %vm1940
        %vm1948 = vmand %vm1934, %vm1941
        %v1949 = vsel %vm1942, 1, 0
        %v1950 = vsel %vm1943, 1, 0
        %v1951 = vsel %vm1944, 1, 0
        %v1952 = vsel %vm1945, 1, 0
        %v1953 = vsel %vm1946, 1, 0
        %v1954 = vsel %vm1947, 1, 0
        %v1955 = vsel %vm1948, 1, 0
        %vm1956 = vcmp.eq.s32.totalorder %v1949, 1
        %vm1957 = vcmp.eq.s32.totalorder %v1950, 1
        %vm1958 = vcmp.eq.s32.totalorder %v1951, 1
        %vm1959 = vcmp.eq.s32.totalorder %v1952, 1
        %vm1960 = vcmp.eq.s32.totalorder %v1953, 1
        %vm1961 = vcmp.eq.s32.totalorder %v1954, 1
        %vm1962 = vcmp.eq.s32.totalorder %v1955, 1
        %v1963 = vsel %vm1956, %v1914, 0.0
        %v1964 = vsel %vm1957, %v1915, 0.0
        %v1965 = vsel %vm1958, %v1916, 0.0
        %v1966 = vsel %vm1959, %v1917, 0.0
        %v1967 = vsel %vm1960, %v1918, 0.0
        %v1968 = vsel %vm1961, %v1919, 0.0
        %v1969 = vsel %vm1962, %v1920, 0.0
        %v1970 = vpack.c.bf16 %v1964, %v1963
        %v1971 = vpack.c.bf16 %v1966, %v1965
        %v1972 = vpack.c.bf16 %v1968, %v1967
        %v1973 = vpack.c.bf16 %v1969, %v1969
        %v1974 = vld [vmem:[%s6] sm:$0xff]
        %v1975 = vld [vmem:[%s6 + $0x8] sm:$0xff]
        %v1976 = vld [vmem:[%s6 + $0x10] sm:$0xff]
        %v1977 = vld [vmem:[%s6 + $0x18] sm:$0xff]
        %v1978 = vld [vmem:[%s6 + $0x20] sm:$0xff]
        %v1979 = vld [vmem:[%s6 + $0x28] sm:$0xff]
        %v1980 = vld [vmem:[%s6 + $0x30] sm:$0xff]
        %v1981 = vld [vmem:[%s6 + $0x38] sm:$0xff]
        %v1982 = vld [vmem:[%s6 + $0x40] sm:$0xff]
        %v1983 = vld [vmem:[%s6 + $0x48] sm:$0xff]
        %v1984 = vld [vmem:[%s6 + $0x50] sm:$0xff]
        %v1985 = vld [vmem:[%s6 + $0x58] sm:$0xff]
        %v1986 = vld [vmem:[%s6 + $0x60] sm:$0xff]
        %v1987 = vld [vmem:[%s6 + $0x68] sm:$0xff]
        %v1988 = vld [vmem:[%s6 + $0x70] sm:$0xff]
        %v1989 = vld [vmem:[%s6 + $0x78] sm:$0xff]
        %v1990 = vld [vmem:[%s6 + $0x80] sm:$0xff]
        %v1991 = vld [vmem:[%s6 + $0x88] sm:$0xff]
        %v1992 = vld [vmem:[%s6 + $0x90] sm:$0xff]
        %v1993 = vld [vmem:[%s6 + $0x98] sm:$0xff]
        %v1994 = vld [vmem:[%s6 + $0xa0] sm:$0xff]
        %v1995 = vld [vmem:[%s6 + $0xa8] sm:$0xff]
        %v1996 = vld [vmem:[%s6 + $0xb0] sm:$0xff]
        %v1997 = vld [vmem:[%s6 + $0xb8] sm:$0xff]
        %v1998 = vld [vmem:[%s6 + $0xc0] sm:$0xff]
        %v1999 = vld [vmem:[%s6 + $0xc8] sm:$0xff]
        %v2000 = vld [vmem:[%s6 + $0xd0] sm:$0xff]
        %v2001 = vld [vmem:[%s6 + $0xd8] sm:$0xff]
        %v2002 = vld [vmem:[%s6 + $0xe0] sm:$0xff]
        %v2003 = vld [vmem:[%s6 + $0xe8] sm:$0xff]
        %v2004 = vld [vmem:[%s6 + $0xf0] sm:$0xff]
        %v2005 = vld [vmem:[%s6 + $0xf8] sm:$0xff]
        %v2006 = vld [vmem:[%s6 + $0x100] sm:$0xff]
        %v2007 = vld [vmem:[%s6 + $0x108] sm:$0xff]
        %v2008 = vld [vmem:[%s6 + $0x110] sm:$0xff]
        %v2009 = vld [vmem:[%s6 + $0x118] sm:$0xff]
        %v2010 = vld [vmem:[%s6 + $0x120] sm:$0xff]
        %v2011 = vld [vmem:[%s6 + $0x128] sm:$0xff]
        %v2012 = vld [vmem:[%s6 + $0x130] sm:$0xff]
        %v2013 = vld [vmem:[%s6 + $0x138] sm:$0xff]
        %v2014 = vld [vmem:[%s6 + $0x140] sm:$0xff]
        %v2015 = vld [vmem:[%s6 + $0x148] sm:$0xff]
        %v2016 = vld [vmem:[%s6 + $0x150] sm:$0xff]
        %v2017 = vld [vmem:[%s6 + $0x158] sm:$0xff]
        %v2018 = vld [vmem:[%s6 + $0x160] sm:$0xff]
        %v2019 = vld [vmem:[%s6 + $0x168] sm:$0xff]
        %v2020 = vld [vmem:[%s6 + $0x170] sm:$0xff]
        %v2021 = vld [vmem:[%s6 + $0x178] sm:$0xff]
        %v2022 = vld [vmem:[%s7] sm:$0x3]
        %v2024 = vshrl.u32 %v1970, 16
        %v2026 = vshll.u32 %v1970, 16
        %v2028 = vrot.slane %v2026, 1
        %v2029 = vor.u32 %v2024, %v2028
        %v2031 = vshll.u32 %v1971, 16
        %v2033 = vrot.slane %v2031, 1
        %v2034 = vsel %vm465, %v2029, %v2033
        %v2035 = vshrl.u32 %v1971, 16
        %v2037 = vor.u32 %v2035, %v2033
        %v2039 = vshll.u32 %v1972, 16
        %v2041 = vrot.slane %v2039, 1
        %v2042 = vsel %vm465, %v2037, %v2041
        %v2043 = vshrl.u32 %v1972, 16
        %v2045 = vor.u32 %v2043, %v2041
        %v2047 = vshll.u32 %v1973, 16
        %v2049 = vrot.slane %v2047, 1
        %v2050 = vsel %vm465, %v2045, %v2049
        %v2058 = vrot.slane %v1970, 1
        %v2059 = vrot.slane %v1971, 1
        %v2060 = vsel %vm509, %v2058, %v2059
        %v2061 = vrot.slane %v1972, 1
        %v2062 = vsel %vm509, %v2059, %v2061
        %v2063 = vrot.slane %v1973, 1
        %v2064 = vsel %vm509, %v2061, %v2063
        %v2069 = vlaneseq
        %v2070 = vshrl.u32 %v2069, 7
        %v2071 = vsub.s32 0, %v2070
        %v2072 = vrot.slane %v2022, %v2071
        %v2073 = vlaneseq
        %v2074 = vshrl.u32 %v2073, 7
        %v2075 = vsub.s32 1, %v2074
        %v2076 = vrot.slane %v2022, %v2075
        %v2127 = vunpack.c.l.b16 %v1974
        %v2128 = vunpack.c.h.b16 %v1974
        %v2129 = vunpack.c.l.b16 %v1975
        %v2130 = vunpack.c.h.b16 %v1975
        %v2131 = vunpack.c.l.b16 %v1976
        %v2132 = vunpack.c.h.b16 %v1976
        %v2133 = vunpack.c.l.b16 %v1977
        %v2134 = vunpack.c.h.b16 %v1977
        %v2135 = vunpack.c.l.b16 %v1978
        %v2136 = vunpack.c.h.b16 %v1978
        %v2137 = vunpack.c.l.b16 %v1979
        %v2138 = vunpack.c.h.b16 %v1979
        %v2139 = vunpack.c.l.b16 %v1980
        %v2140 = vunpack.c.h.b16 %v1980
        %v2141 = vunpack.c.l.b16 %v1981
        %v2142 = vunpack.c.h.b16 %v1981
        %v2143 = vunpack.c.l.b16 %v1982
        %v2144 = vunpack.c.h.b16 %v1982
        %v2145 = vunpack.c.l.b16 %v1983
        %v2146 = vunpack.c.h.b16 %v1983
        %v2147 = vunpack.c.l.b16 %v1984
        %v2148 = vunpack.c.h.b16 %v1984
        %v2149 = vunpack.c.l.b16 %v1985
        %v2150 = vunpack.c.h.b16 %v1985
        %v2151 = vunpack.c.l.b16 %v1986
        %v2152 = vunpack.c.h.b16 %v1986
        %v2153 = vunpack.c.l.b16 %v1987
        %v2154 = vunpack.c.h.b16 %v1987
        %v2155 = vunpack.c.l.b16 %v1988
        %v2156 = vunpack.c.h.b16 %v1988
        %v2157 = vunpack.c.l.b16 %v1989
        %v2158 = vunpack.c.h.b16 %v1989
        %v2159 = vunpack.c.l.b16 %v1990
        %v2160 = vunpack.c.h.b16 %v1990
        %v2161 = vunpack.c.l.b16 %v1991
        %v2162 = vunpack.c.h.b16 %v1991
        %v2163 = vunpack.c.l.b16 %v1992
        %v2164 = vunpack.c.h.b16 %v1992
        %v2165 = vunpack.c.l.b16 %v1993
        %v2166 = vunpack.c.h.b16 %v1993
        %v2167 = vunpack.c.l.b16 %v1994
        %v2168 = vunpack.c.h.b16 %v1994
        %v2169 = vunpack.c.l.b16 %v1995
        %v2170 = vunpack.c.h.b16 %v1995
        %v2171 = vunpack.c.l.b16 %v1996
        %v2172 = vunpack.c.h.b16 %v1996
        %v2173 = vunpack.c.l.b16 %v1997
        %v2174 = vunpack.c.h.b16 %v1997
        %v2175 = vunpack.c.l.b16 %v1998
        %v2176 = vunpack.c.h.b16 %v1998
        %v2177 = vunpack.c.l.b16 %v1999
        %v2178 = vunpack.c.h.b16 %v1999
        %v2179 = vunpack.c.l.b16 %v2000
        %v2180 = vunpack.c.h.b16 %v2000
        %v2181 = vunpack.c.l.b16 %v2001
        %v2182 = vunpack.c.h.b16 %v2001
        %v2183 = vunpack.c.l.b16 %v2002
        %v2184 = vunpack.c.h.b16 %v2002
        %v2185 = vunpack.c.l.b16 %v2003
        %v2186 = vunpack.c.h.b16 %v2003
        %v2187 = vunpack.c.l.b16 %v2004
        %v2188 = vunpack.c.h.b16 %v2004
        %v2189 = vunpack.c.l.b16 %v2005
        %v2190 = vunpack.c.h.b16 %v2005
        %v2191 = vunpack.c.l.b16 %v2006
        %v2192 = vunpack.c.h.b16 %v2006
        %v2193 = vunpack.c.l.b16 %v2007
        %v2194 = vunpack.c.h.b16 %v2007
        %v2195 = vunpack.c.l.b16 %v2008
        %v2196 = vunpack.c.h.b16 %v2008
        %v2197 = vunpack.c.l.b16 %v2009
        %v2198 = vunpack.c.h.b16 %v2009
        %v2199 = vunpack.c.l.b16 %v2010
        %v2200 = vunpack.c.h.b16 %v2010
        %v2201 = vunpack.c.l.b16 %v2011
        %v2202 = vunpack.c.h.b16 %v2011
        %v2203 = vunpack.c.l.b16 %v2012
        %v2204 = vunpack.c.h.b16 %v2012
        %v2205 = vunpack.c.l.b16 %v2013
        %v2206 = vunpack.c.h.b16 %v2013
        %v2207 = vunpack.c.l.b16 %v2014
        %v2208 = vunpack.c.h.b16 %v2014
        %v2209 = vunpack.c.l.b16 %v2015
        %v2210 = vunpack.c.h.b16 %v2015
        %v2211 = vunpack.c.l.b16 %v2016
        %v2212 = vunpack.c.h.b16 %v2016
        %v2213 = vunpack.c.l.b16 %v2017
        %v2214 = vunpack.c.h.b16 %v2017
        %v2215 = vunpack.c.l.b16 %v2018
        %v2216 = vunpack.c.h.b16 %v2018
        %v2217 = vunpack.c.l.b16 %v2019
        %v2218 = vunpack.c.h.b16 %v2019
        %v2219 = vunpack.c.l.b16 %v2020
        %v2220 = vunpack.c.h.b16 %v2020
        %v2221 = vunpack.c.l.b16 %v2021
        %v2222 = vunpack.c.h.b16 %v2021
        %v2223 = vpack.c.b16 %v2129, %v2127
        %v2224 = vpack.c.b16 %v2130, %v2128
        %v2225 = vpack.c.b16 %v2133, %v2131
        %v2226 = vpack.c.b16 %v2134, %v2132
        %v2227 = vpack.c.b16 %v2137, %v2135
        %v2228 = vpack.c.b16 %v2138, %v2136
        %v2229 = vpack.c.b16 %v2141, %v2139
        %v2230 = vpack.c.b16 %v2142, %v2140
        %v2231 = vpack.c.b16 %v2145, %v2143
        %v2232 = vpack.c.b16 %v2146, %v2144
        %v2233 = vpack.c.b16 %v2149, %v2147
        %v2234 = vpack.c.b16 %v2150, %v2148
        %v2235 = vpack.c.b16 %v2153, %v2151
        %v2236 = vpack.c.b16 %v2154, %v2152
        %v2237 = vpack.c.b16 %v2157, %v2155
        %v2238 = vpack.c.b16 %v2158, %v2156
        %v2239 = vpack.c.b16 %v2161, %v2159
        %v2240 = vpack.c.b16 %v2162, %v2160
        %v2241 = vpack.c.b16 %v2165, %v2163
        %v2242 = vpack.c.b16 %v2166, %v2164
        %v2243 = vpack.c.b16 %v2169, %v2167
        %v2244 = vpack.c.b16 %v2170, %v2168
        %v2245 = vpack.c.b16 %v2173, %v2171
        %v2246 = vpack.c.b16 %v2174, %v2172
        %v2247 = vpack.c.b16 %v2177, %v2175
        %v2248 = vpack.c.b16 %v2178, %v2176
        %v2249 = vpack.c.b16 %v2181, %v2179
        %v2250 = vpack.c.b16 %v2182, %v2180
        %v2251 = vpack.c.b16 %v2185, %v2183
        %v2252 = vpack.c.b16 %v2186, %v2184
        %v2253 = vpack.c.b16 %v2189, %v2187
        %v2254 = vpack.c.b16 %v2190, %v2188
        %v2255 = vpack.c.b16 %v2193, %v2191
        %v2256 = vpack.c.b16 %v2194, %v2192
        %v2257 = vpack.c.b16 %v2197, %v2195
        %v2258 = vpack.c.b16 %v2198, %v2196
        %v2259 = vpack.c.b16 %v2201, %v2199
        %v2260 = vpack.c.b16 %v2202, %v2200
        %v2261 = vpack.c.b16 %v2205, %v2203
        %v2262 = vpack.c.b16 %v2206, %v2204
        %v2263 = vpack.c.b16 %v2209, %v2207
        %v2264 = vpack.c.b16 %v2210, %v2208
        %v2265 = vpack.c.b16 %v2213, %v2211
        %v2266 = vpack.c.b16 %v2214, %v2212
        %v2267 = vpack.c.b16 %v2217, %v2215
        %v2268 = vpack.c.b16 %v2218, %v2216
        %v2269 = vpack.c.b16 %v2221, %v2219
        %v2270 = vpack.c.b16 %v2222, %v2220
        %2319 = vmatprep.subr.bf16.mxu0 %v2224
        %2320 = vmatpush1.bf16.msra.mxu0 %v2223
        %2321 = vmatprep.subr.bf16.mxu0 %v2226
        %2322 = vmatpush1.bf16.msra.mxu0 %v2225
        %2323 = vmatprep.subr.bf16.mxu0 %v2228
        %2324 = vmatpush1.bf16.msra.mxu0 %v2227
        %2325 = vmatprep.subr.bf16.mxu0 %v2230
        %2326 = vmatpush1.bf16.msra.mxu0 %v2229
        %2327 = vmatprep.subr.bf16.mxu0 %v2232
        %2328 = vmatpush1.bf16.msra.mxu0 %v2231
        %2329 = vmatprep.subr.bf16.mxu0 %v2234
        %2330 = vmatpush1.bf16.msra.mxu0 %v2233
        %2331 = vmatprep.subr.bf16.mxu0 %v2236
        %2332 = vmatpush1.bf16.msra.mxu0 %v2235
        %2333 = vmatprep.subr.bf16.mxu0 %v2238
        %2334 = vmatpush1.bf16.msra.mxu0 %v2237
        %2335 = vmatprep.subr.bf16.mxu0 %v2240
        %2336 = vmatpush1.bf16.msra.mxu0 %v2239
        %2337 = vmatprep.subr.bf16.mxu0 %v2242
        %2338 = vmatpush1.bf16.msra.mxu0 %v2241
        %2339 = vmatprep.subr.bf16.mxu0 %v2244
        %2340 = vmatpush1.bf16.msra.mxu0 %v2243
        %2341 = vmatprep.subr.bf16.mxu0 %v2246
        %2342 = vmatpush1.bf16.msra.mxu0 %v2245
        %2343 = vmatprep.subr.bf16.mxu0 %v2248
        %2344 = vmatpush1.bf16.msra.mxu0 %v2247
        %2345 = vmatprep.subr.bf16.mxu0 %v2250
        %2346 = vmatpush1.bf16.msra.mxu0 %v2249
        %2347 = vmatprep.subr.bf16.mxu0 %v2252
        %2348 = vmatpush1.bf16.msra.mxu0 %v2251
        %2349 = vmatprep.subr.bf16.mxu0 %v2254
        %2350 = vmatpush1.bf16.msra.mxu0 %v2253
        %2351 = vmatprep.mubr.bf16.mxu0 %v2034
        %2352 = vmatmul.mubr.bf16.gmra.mrb[0].mxu0 %v1970
        %v2353 = vpop.f32.mrb[0].mxu0
        %v2354 = vadd.f32 %v2072, %v2353
        %v2355 = vpop.f32.mrb[0].mxu0
        %v2356 = vadd.f32 %v2076, %v2355
        %v2357 = vpop.f32.mrb[0].mxu0
        %v2358 = vadd.f32 %v2072, %v2357
        %v2359 = vpop.f32.mrb[0].mxu0
        %v2360 = vadd.f32 %v2076, %v2359
        %2361 = vmatprep.mubr.bf16.mxu0 %v2042
        %2362 = vmatmul.mubr.bf16.gmra.mrb[0].mxu0 %v1971
        %v2363 = vpop.f32.mrb[0].mxu0
        %v2364 = vadd.f32 %v2072, %v2363
        %v2365 = vpop.f32.mrb[0].mxu0
        %v2366 = vadd.f32 %v2076, %v2365
        %v2367 = vpop.f32.mrb[0].mxu0
        %v2368 = vadd.f32 %v2072, %v2367
        %v2369 = vpop.f32.mrb[0].mxu0
        %v2370 = vadd.f32 %v2076, %v2369
        %2371 = vmatprep.mubr.bf16.mxu0 %v2050
        %2372 = vmatmul.mubr.bf16.gmra.mrb[0].mxu0 %v1972
        %v2373 = vpop.f32.mrb[0].mxu0
        %v2374 = vadd.f32 %v2072, %v2373
        %v2375 = vpop.f32.mrb[0].mxu0
        %v2376 = vadd.f32 %v2076, %v2375
        %v2377 = vpop.f32.mrb[0].mxu0
        %v2378 = vadd.f32 %v2072, %v2377
        %v2379 = vpop.f32.mrb[0].mxu0
        %v2380 = vadd.f32 %v2076, %v2379
        %2381 = vdwg.mxu0
        %2382 = vmatprep.subr.bf16.mxu0 %v2256
        %2383 = vmatpush1.bf16.msra.mxu0 %v2255
        %2384 = vmatprep.subr.bf16.mxu0 %v2258
        %2385 = vmatpush1.bf16.msra.mxu0 %v2257
        %2386 = vmatprep.subr.bf16.mxu0 %v2260
        %2387 = vmatpush1.bf16.msra.mxu0 %v2259
        %2388 = vmatprep.subr.bf16.mxu0 %v2262
        %2389 = vmatpush1.bf16.msra.mxu0 %v2261
        %2390 = vmatprep.subr.bf16.mxu0 %v2264
        %2391 = vmatpush1.bf16.msra.mxu0 %v2263
        %2392 = vmatprep.subr.bf16.mxu0 %v2266
        %2393 = vmatpush1.bf16.msra.mxu0 %v2265
        %2394 = vmatprep.subr.bf16.mxu0 %v2268
        %2395 = vmatpush1.bf16.msra.mxu0 %v2267
        %2396 = vmatprep.subr.bf16.mxu0 %v2270
        %2397 = vmatpush1.bf16.msra.mxu0 %v2269
        %2398 = vmatprep.subr.bf16.mxu0 0
        %2399 = vmatpush1.bf16.msra.mxu0 0
        %2400 = vmatprep.subr.bf16.mxu0 0
        %2401 = vmatpush1.bf16.msra.mxu0 0
        %2402 = vmatprep.subr.bf16.mxu0 0
        %2403 = vmatpush1.bf16.msra.mxu0 0
        %2404 = vmatprep.subr.bf16.mxu0 0
        %2405 = vmatpush1.bf16.msra.mxu0 0
        %2406 = vmatprep.subr.bf16.mxu0 0
        %2407 = vmatpush1.bf16.msra.mxu0 0
        %2408 = vmatprep.subr.bf16.mxu0 0
        %2409 = vmatpush1.bf16.msra.mxu0 0
        %2410 = vmatprep.subr.bf16.mxu0 0
        %2411 = vmatpush1.bf16.msra.mxu0 0
        %2412 = vmatprep.subr.bf16.mxu0 0
        %2413 = vmatpush1.bf16.msra.mxu0 0
        %2414 = vmatprep.mubr.bf16.mxu0 0
        %2415 = vmatmul.mubr.bf16.gmra.mrb[0].mxu0 %v2060
        %v2416 = vpop.f32.mrb[0].mxu0
        %v2417 = vadd.f32 %v2354, %v2416
        %v2418 = vpop.f32.mrb[0].mxu0
        %v2419 = vadd.f32 %v2356, %v2418
        %v2420 = vpop.f32.mrb[0].mxu0
        %v2421 = vadd.f32 %v2358, %v2420
        %v2422 = vpop.f32.mrb[0].mxu0
        %v2423 = vadd.f32 %v2360, %v2422
        %2424 = vmatprep.mubr.bf16.mxu0 0
        %2425 = vmatmul.mubr.bf16.gmra.mrb[0].mxu0 %v2062
        %v2426 = vpop.f32.mrb[0].mxu0
        %v2427 = vadd.f32 %v2364, %v2426
        %v2428 = vpop.f32.mrb[0].mxu0
        %v2429 = vadd.f32 %v2366, %v2428
        %v2430 = vpop.f32.mrb[0].mxu0
        %v2431 = vadd.f32 %v2368, %v2430
        %v2432 = vpop.f32.mrb[0].mxu0
        %v2433 = vadd.f32 %v2370, %v2432
        %2434 = vmatprep.mubr.bf16.mxu0 0
        %2435 = vmatmul.mubr.bf16.gmra.mrb[0].mxu0 %v2064
        %v2436 = vpop.f32.mrb[0].mxu0
        %v2437 = vadd.f32 %v2374, %v2436
        %v2438 = vpop.f32.mrb[0].mxu0
        %v2439 = vadd.f32 %v2376, %v2438
        %v2440 = vpop.f32.mrb[0].mxu0
        %v2441 = vadd.f32 %v2378, %v2440
        %v2442 = vpop.f32.mrb[0].mxu0
        %v2443 = vadd.f32 %v2380, %v2442
        %2444 = vdwg.mxu0
        %v2445 = vmax.f32 %v2417, 0.0
        %v2446 = vmax.f32 %v2419, 0.0
        %v2447 = vmax.f32 %v2421, 0.0
        %v2448 = vmax.f32 %v2423, 0.0
        %v2449 = vmax.f32 %v2427, 0.0
        %v2450 = vmax.f32 %v2429, 0.0
        %v2451 = vmax.f32 %v2431, 0.0
        %v2452 = vmax.f32 %v2433, 0.0
        %v2453 = vmax.f32 %v2437, 0.0
        %v2454 = vmax.f32 %v2439, 0.0
        %v2455 = vmax.f32 %v2441, 0.0
        %v2456 = vmax.f32 %v2443, 0.0
        %2469 = vrot.lane.b32.xlu0 %v2445, 64
        %v2470 = vpop.permute.xlu0 %2469
        %2471 = vrot.lane.b32.xlu0 %v2446, 64
        %v2472 = vpop.permute.xlu0 %2471
        %2473 = vrot.lane.b32.xlu0 %v2447, 64
        %v2474 = vpop.permute.xlu0 %2473
        %2475 = vrot.lane.b32.xlu0 %v2448, 64
        %v2476 = vpop.permute.xlu0 %2475
        %2477 = vrot.lane.b32.xlu0 %v2449, 64
        %v2478 = vpop.permute.xlu0 %2477
        %2479 = vrot.lane.b32.xlu0 %v2450, 64
        %v2480 = vpop.permute.xlu0 %2479
        %2481 = vrot.lane.b32.xlu0 %v2451, 64
        %v2482 = vpop.permute.xlu0 %2481
        %2483 = vrot.lane.b32.xlu0 %v2452, 64
        %v2484 = vpop.permute.xlu0 %2483
        %2485 = vrot.lane.b32.xlu0 %v2453, 64
        %v2486 = vpop.permute.xlu0 %2485
        %2487 = vrot.lane.b32.xlu0 %v2454, 64
        %v2488 = vpop.permute.xlu0 %2487
        %2489 = vrot.lane.b32.xlu0 %v2455, 64
        %v2490 = vpop.permute.xlu0 %2489
        %2491 = vrot.lane.b32.xlu0 %v2456, 64
        %v2492 = vpop.permute.xlu0 %2491
        %v2493 = vsel %vm613, %v2470, %v2472
        %v2494 = vsel %vm613, %v2474, %v2476
        %v2495 = vsel %vm613, %v2478, %v2480
        %v2496 = vsel %vm613, %v2482, %v2484
        %v2497 = vsel %vm613, %v2486, %v2488
        %v2498 = vsel %vm613, %v2490, %v2492
        %v2511 = vsel %vm613, %v380, %v2470
        %v2512 = vsel %vm613, %v381, %v2474
        %v2513 = vsel %vm613, %v382, %v2478
        %v2514 = vsel %vm613, %v383, %v2482
        %v2515 = vsel %vm613, %v384, %v2486
        %v2516 = vsel %vm613, %v385, %v2490
        %2517 = vst [vmem:[%s366] sm:$0xff] %v2511
        %2518 = vst [vmem:[%s366 + $0x8] sm:$0xff] %v2493
        %2519 = vst [vmem:[%s366 + $0x10] sm:$0xff] %v2512
        %2520 = vst [vmem:[%s366 + $0x18] sm:$0xff] %v2494
        %2521 = vst [vmem:[%s366 + $0x20] sm:$0xff] %v2513
        %2522 = vst [vmem:[%s366 + $0x28] sm:$0xff] %v2495
        %2523 = vst [vmem:[%s366 + $0x30] sm:$0xff] %v2514
        %2524 = vst [vmem:[%s366 + $0x38] sm:$0xff] %v2496
        %2525 = vst [vmem:[%s366 + $0x40] sm:$0xff] %v2515
        %2526 = vst [vmem:[%s366 + $0x48] sm:$0xff] %v2497
        %2527 = vst [vmem:[%s366 + $0x50] sm:$0xff] %v2516
        %2528 = vst [vmem:[%s366 + $0x58] sm:$0xff] %v2498
        %s2529 = sand.u32 %s229, 1
        %s2530 = scalar_lea.sflag [#allocation4], %s2529
        %s2531 = sand.u32 %s229, 1
        %s2532 = smul.addr %s2531, 96
        %s2533 = scalar_lea.vmem [#allocation5], %s2532
        // Predicated region
        $region57: #{tpu_custom_call.1} parent=51 // pred_check
          %p2534 = pneg %p239
        $region58: #{tpu_custom_call.1} parent=51 // pred_check_branch
          %2536 = sbr.rel (%p2534) target = $region60
        $region59: #{tpu_custom_call.1} parent=51 // pred_region
          %s2537 = smul.u32 6, %s30
          %s2539 = ssub.s32 1536, 1536
          %2540 = vsyncadd %s2530, %s2539
          %s2541 = smul.addr %s2537, 2
          %s2542 = smul.addr %s29, 12
          %s2543 = sadd.s32 %s2541, %s2542
          %s2544 = smul.addr %s2543, 128
          %s2545 = scalar_lea.hbm %s8, %s2544
          %s2546 = sshll.u32 %s2533, 4
          %s2547 = int_to_ptr.vmem [resolvable:$true] %s2546
          %2552 = dma.vmem_to_hbm [thread:$0]  %s2547, 1536, %s2545, %s2530, 256, 256, 16
        $region60: #{tpu_custom_call.1} parent=51 // pred_fallthru
          _
      $region52: #{tpu_custom_call.1} parent=5 // pred_fallthru
        _
      %p2553 = scmp.le.s32.totalorder 2, %s20
      // Predicated region
      $region61: #{tpu_custom_call.1} parent=5 // pred_check
        %p2554 = pneg %p2553
      $region62: #{tpu_custom_call.1} parent=5 // pred_check_branch
        %2556 = sbr.rel (%p2554) target = $region64
      $region63: #{tpu_custom_call.1} parent=5 // pred_region
        %s2557 = ssub.s32 %s20, 2
        // Predicated region
        $region65: #{tpu_custom_call.1} parent=63 // pred_check
          %p2558 = pneg %p245
        $region66: #{tpu_custom_call.1} parent=63 // pred_check_branch
          %2560 = sbr.rel (%p2558) target = $region68
        $region67: #{tpu_custom_call.1} parent=63 // pred_region
          %s2561 = sand.u32 %s230, 1
          %s2562 = scalar_lea.sflag [#allocation4], %s2561
          %s2563 = sand.u32 %s230, 1
          %s2564 = smul.addr %s2563, 96
          %s2565 = scalar_lea.vmem [#allocation5], %s2564
          %2566 = dma.done %s2562, 1536
        $region68: #{tpu_custom_call.1} parent=63 // pred_fallthru
          _
      $region64: #{tpu_custom_call.1} parent=5 // pred_fallthru
        _
    $region6: #{tpu_custom_call.1} parent=1 // loop_footer
      %s24 = sadd.s32 1, %s20
    $region7: #{tpu_custom_call.1} parent=1 // loop_footer_branch
      %19 = sbr.rel target = $region3
    $region8: #{tpu_custom_call.1} parent=1 // loop_exit
      _
    %2567 = vsyncpa [#allocation3], 1
    %s2568 = scalar_lea.sflag [#allocation3], 1
    %2569 = vsyncpa %s2568, 1
    %2570 = vsyncpa [#allocation4], 1
    %s2571 = scalar_lea.sflag [#allocation4], 1
    %2572 = vsyncpa %s2571, 1

</llo_original>
